<compile_context>
chip_gen: v6e
topology: v6e:2x2x1
jax: 0.10.0
libtpu: 0.0.40
codegen_flags: <defaults>
</compile_context>

<pallas_src>
import jax
import jax.numpy as jnp
from jax.experimental import pallas as pl
from jax.experimental.pallas import tpu as pltpu

# ----------------------------- configuration --------------------------------
B = 2                 # batches
N = 16                # sparse points per batch (fixed for this synthetic test)
HEADS = 4
DIM_HEAD = 8
INNER = HEADS * DIM_HEAD          # 32
QUERY_DIM = INNER                 # pos_emb add requires query_dim == inner_dim
CTX_DIM = 16                      # context channel dim
SPATIAL = (16, 16, 16)            # BEV spatial_dim
RES_LEVEL = 2                     # resolution_level == stride
STRIDE = (RES_LEVEL, RES_LEVEL, RES_LEVEL)
BEV_H = SPATIAL[0] // RES_LEVEL   # 8
BEV_W = SPATIAL[1] // RES_LEVEL   # 8
CTX_H, CTX_W = 8, 8               # context emb spatial dims
M = CTX_H * CTX_W                 # context_len = 64
SCALE = DIM_HEAD ** (-0.5)
NEG_MAX = float(jnp.finfo(jnp.float32).max)   # used by the pure-JAX reference only
MASK_BIAS = -1e30                              # additive mask bias inside the kernel


# ------------------------------ Pallas kernel --------------------------------
def cross_attn_kernel(x_ref, pe_ref, ctx_ref, mask_ref,
                      wq_ref, wkv_ref, wo_ref, bo_ref,
                      out_ref, acc_ref):
    # Whole problem processed in a single grid step:
    #   x_ref    [B*N, QUERY_DIM]   sparse features (all batches)
    #   pe_ref   [B*N, INNER]       gathered BEV positional embedding
    #   ctx_ref  [B*M, CTX_DIM]     context tokens (sketch emb + ctx pos emb)
    #   mask_ref [B*N, M]           1.0 where attention is allowed
    #   wq_ref   [QUERY_DIM, INNER]
    #   wkv_ref  [CTX_DIM, 2*INNER] fused K|V projection weights
    #   wo_ref   [INNER, QUERY_DIM]
    #   bo_ref   [1, QUERY_DIM]
    #   acc_ref  [B*N, INNER]       VMEM slab for per-head outputs (no concat)
    f = x_ref[...] + pe_ref[...]                                    # [B*N, INNER]

    # Batch-fused projections: one MXU pass for q, one for fused K/V.
    q = jnp.dot(f, wq_ref[...], preferred_element_type=jnp.float32) * SCALE   # [B*N, INNER]
    kv = jnp.dot(ctx_ref[...], wkv_ref[...],
                 preferred_element_type=jnp.float32)                # [B*M, 2*INNER]

    # Additive mask bias computed once (replaces per-head masked_fill/select).
    # NOTE: if any query row ever had an all-false mask it would silently attend
    # uniformly; not possible with the clamped-neighborhood mask glue below.
    bias = jnp.where(mask_ref[...] > 0.0, 0.0, MASK_BIAS).astype(jnp.float32)  # [B*N, M]

    # Static (fully unrolled) loops: B * HEADS = 8 tiny attention tiles.
    for b in range(B):
        q_b = q[b * N:(b + 1) * N, :]                               # [N, INNER]
        kv_b = kv[b * M:(b + 1) * M, :]                             # [M, 2*INNER]
        bias_b = bias[b * N:(b + 1) * N, :]                         # [N, M]
        for h in range(HEADS):
            lo = h * DIM_HEAD
            hi = lo + DIM_HEAD
            qh = kv_h = None  # (clarity only)
            qh = q_b[:, lo:hi]                                      # [N, D]
            kh = kv_b[:, lo:hi]                                     # [M, D]
            vh = kv_b[:, INNER + lo:INNER + hi]                     # [M, D]
            sim = jnp.dot(qh, kh.T, preferred_element_type=jnp.float32) + bias_b
            sim = sim - jnp.max(sim, axis=-1, keepdims=True)        # stable softmax
            p = jnp.exp(sim)
            attn = p * pl.reciprocal(jnp.sum(p, axis=-1, keepdims=True), approx=True)
            # write this head's output straight into its column slab
            acc_ref[b * N:(b + 1) * N, lo:hi] = jnp.dot(
                attn, vh, preferred_element_type=jnp.float32)       # [N, D]

    res = jnp.dot(acc_ref[...], wo_ref[...],
                  preferred_element_type=jnp.float32) + bo_ref[...]
    out_ref[...] = res.astype(out_ref.dtype)                        # single full-block write


def cross_attention_pallas(x, pe, ctx, mask, wq, wk, wv, wo, bo):
    # Flatten batch into the row dim (free reshapes) and fuse the K/V weights once.
    x2d = x.reshape(B * N, QUERY_DIM)
    pe2d = pe.reshape(B * N, INNER)
    ctx2d = ctx.reshape(B * M, CTX_DIM)
    mask2d = mask.reshape(B * N, M)
    wkv = jnp.concatenate([wk, wv], axis=1)                         # [CTX_DIM, 2*INNER]

    out2d = pl.pallas_call(
        cross_attn_kernel,
        out_shape=jax.ShapeDtypeStruct((B * N, QUERY_DIM), jnp.float32),
        grid_spec=pltpu.PrefetchScalarGridSpec(
            num_scalar_prefetch=0,
            grid=(1,),                                              # single invocation
            in_specs=[
                pl.BlockSpec((B * N, QUERY_DIM), lambda i: (0, 0)),
                pl.BlockSpec((B * N, INNER), lambda i: (0, 0)),
                pl.BlockSpec((B * M, CTX_DIM), lambda i: (0, 0)),
                pl.BlockSpec((B * N, M), lambda i: (0, 0)),
                pl.BlockSpec((QUERY_DIM, INNER), lambda i: (0, 0)),
                pl.BlockSpec((CTX_DIM, 2 * INNER), lambda i: (0, 0)),
                pl.BlockSpec((INNER, QUERY_DIM), lambda i: (0, 0)),
                pl.BlockSpec((1, QUERY_DIM), lambda i: (0, 0)),
            ],
            out_specs=pl.BlockSpec((B * N, QUERY_DIM), lambda i: (0, 0)),
            scratch_shapes=[pltpu.VMEM((B * N, INNER), jnp.float32)],
        ),
    )(x2d, pe2d, ctx2d, mask2d, wq, wkv, wo, bo)
    return out2d.reshape(B, N, QUERY_DIM)


# ------------------------------- JAX glue ------------------------------------
def gather_pos_emb(pos_embedding, coords):
    # get_pos_emb: rescale = floor(coord[:, 1:3] / stride[:2]); gather BEV table
    rescale = jnp.floor(coords[:, 1:3].astype(jnp.float32) /
                        jnp.array(STRIDE[:2], jnp.float32)).astype(jnp.int32)
    return pos_embedding[rescale[:, 0], rescale[:, 1], :]            # [B*N, INNER]


def build_context(ctx_emb, context_pos_embedding):
    # get_context: emb + context_pos_embedding.view(h, w, -1); flatten H*W
    pos = context_pos_embedding.reshape(CTX_H, CTX_W, CTX_DIM)
    emb = ctx_emb + pos[None]
    return emb.reshape(B, M, CTX_DIM)


def build_context_mask(coords):
    # get_context_mask: project coords into context grid, mark a stride-sized
    # neighborhood (with clamping) around each projected point.
    ratio = jnp.array([CTX_H, CTX_W], jnp.float32) / jnp.array(SPATIAL[:2], jnp.float32)
    c2c = coords[:, 1:3].astype(jnp.float32) * ratio
    center = jnp.round(c2c).astype(jnp.int32)                        # [B*N, 2]
    D1, D2 = STRIDE[0], STRIDE[1]
    row_lo = jnp.clip(center[:, 0] - D1, 0, CTX_H - 1)
    row_hi = jnp.clip(center[:, 0] + D1, 0, CTX_H - 1)
    col_lo = jnp.clip(center[:, 1] - D2, 0, CTX_W - 1)
    col_hi = jnp.clip(center[:, 1] + D2, 0, CTX_W - 1)
    hh = jnp.arange(CTX_H)[None, :, None]
    ww = jnp.arange(CTX_W)[None, None, :]
    mask = ((hh >= row_lo[:, None, None]) & (hh <= row_hi[:, None, None]) &
            (ww >= col_lo[:, None, None]) & (ww <= col_hi[:, None, None]))
    return mask.reshape(-1, M).astype(jnp.float32)                   # [B*N, M]


def reference(x, pe, ctx, mask, wq, wk, wv, wo, bo):
    # Mirrors the PyTorch module math (masked_fill with -finfo.max after *scale).
    f = x + pe
    q = jnp.einsum('bnc,cd->bnd', f, wq)
    k = jnp.einsum('bmc,cd->bmd', ctx, wk)
    v = jnp.einsum('bmc,cd->bmd', ctx, wv)
    qh = q.reshape(B, N, HEADS, DIM_HEAD).transpose(0, 2, 1, 3)
    kh = k.reshape(B, M, HEADS, DIM_HEAD).transpose(0, 2, 1, 3)
    vh = v.reshape(B, M, HEADS, DIM_HEAD).transpose(0, 2, 1, 3)
    sim = jnp.einsum('bhnd,bhmd->bhnm', qh, kh) * SCALE
    sim = jnp.where(mask[:, None] > 0, sim, -NEG_MAX)
    attn = jax.nn.softmax(sim, axis=-1)
    out = jnp.einsum('bhnm,bhmd->bhnd', attn, vh)
    out = out.transpose(0, 2, 1, 3).reshape(B, N, INNER)
    return out @ wo + bo


# --------------------------------- main ---------------------------------------
if __name__ == "__main__":
    key = jax.random.PRNGKey(0)
    ks = jax.random.split(key, 10)

    # sparse features and coords (batch_dim = 0; fixed N points per batch)
    x_feats = jax.random.normal(ks[0], (B, N, QUERY_DIM), jnp.float32)
    coords_xyz = jax.random.randint(ks[1], (B * N, 3), 0, SPATIAL[0])   # in [0, 16)
    batch_idx = jnp.repeat(jnp.arange(B), N)[:, None]
    coords = jnp.concatenate([batch_idx, coords_xyz], axis=1)           # [B*N, 4]

    # parameters (deterministic synthetic init, shapes per module __init__)
    wq = jax.random.normal(ks[2], (QUERY_DIM, INNER), jnp.float32) / (QUERY_DIM ** 0.5)
    wk = jax.random.normal(ks[3], (CTX_DIM, INNER), jnp.float32) / (CTX_DIM ** 0.5)
    wv = jax.random.normal(ks[4], (CTX_DIM, INNER), jnp.float32) / (CTX_DIM ** 0.5)
    wo = jax.random.normal(ks[5], (INNER, QUERY_DIM), jnp.float32) / (INNER ** 0.5)
    bo = jax.random.normal(ks[6], (1, QUERY_DIM), jnp.float32) * 0.01
    pos_embedding = jax.random.normal(ks[7], (BEV_H, BEV_W, INNER), jnp.float32) / (INNER ** 0.5)
    context_pos_embedding = jax.random.normal(ks[8], (M, CTX_DIM), jnp.float32) / (INNER ** 0.5)

    # context dict {'type': 'sketch_emb', 'emb': [bs, h, w, c]}
    ctx_emb = jax.random.normal(ks[9], (B, CTX_H, CTX_W, CTX_DIM), jnp.float32)

    # glue: pos-emb gather, context assembly, neighborhood mask
    pe = gather_pos_emb(pos_embedding, coords).reshape(B, N, INNER)
    ctx = build_context(ctx_emb, context_pos_embedding)
    mask = build_context_mask(coords).reshape(B, N, M)

    out = cross_attention_pallas(x_feats, pe, ctx, mask, wq, wk, wv, wo, bo)
    out = jax.block_until_ready(out)

    ref = reference(x_feats, pe, ctx, mask, wq, wk, wv, wo, bo)
    max_err = float(jnp.max(jnp.abs(out - ref)))
    assert max_err < 5e-2, f"mismatch vs reference: {max_err}"

    # TODO(synk): dropout in to_out is identity here (p=0.0 / eval mode), and the
    # sparse-tensor per-batch variable-length loop is modeled with fixed N per batch.
    print("KERNEL_OK")
</pallas_src>

<mosaic_0001>
module attributes {stable_mosaic.version = 11 : i64} {
  func.func @cross_attn_kernel(%arg0: i32, %arg1: memref<32x32xf32, #tpu.memory_space<vmem>>, %arg2: memref<32x32xf32, #tpu.memory_space<vmem>>, %arg3: memref<128x16xf32, #tpu.memory_space<vmem>>, %arg4: memref<32x64xf32, #tpu.memory_space<vmem>>, %arg5: memref<32x32xf32, #tpu.memory_space<vmem>>, %arg6: memref<16x64xf32, #tpu.memory_space<vmem>>, %arg7: memref<32x32xf32, #tpu.memory_space<vmem>>, %arg8: memref<1x32xf32, #tpu.memory_space<vmem>>, %arg9: memref<32x32xf32, #tpu.memory_space<vmem>>, %arg10: memref<32x32xf32, #tpu.memory_space<vmem>>) attributes {dimension_semantics = [#tpu.dimension_semantics<arbitrary>], iteration_bounds = array<i64: 1>, scalar_prefetch = 0 : i64, scratch_operands = 1 : i64, tpu.core_type = #tpu.core_type<tc>, window_params = [{pipeline_mode = #tpu.pipeline_mode<synchronous>, transform_indices = @transform_0, window_bounds = array<i64: 32, 32>}, {pipeline_mode = #tpu.pipeline_mode<synchronous>, transform_indices = @transform_1, window_bounds = array<i64: 32, 32>}, {pipeline_mode = #tpu.pipeline_mode<synchronous>, transform_indices = @transform_2, window_bounds = array<i64: 128, 16>}, {pipeline_mode = #tpu.pipeline_mode<synchronous>, transform_indices = @transform_3, window_bounds = array<i64: 32, 64>}, {pipeline_mode = #tpu.pipeline_mode<synchronous>, transform_indices = @transform_4, window_bounds = array<i64: 32, 32>}, {pipeline_mode = #tpu.pipeline_mode<synchronous>, transform_indices = @transform_5, window_bounds = array<i64: 16, 64>}, {pipeline_mode = #tpu.pipeline_mode<synchronous>, transform_indices = @transform_6, window_bounds = array<i64: 32, 32>}, {pipeline_mode = #tpu.pipeline_mode<synchronous>, transform_indices = @transform_7, window_bounds = array<i64: 1, 32>}, {pipeline_mode = #tpu.pipeline_mode<synchronous>, transform_indices = @transform_8, window_bounds = array<i64: 32, 32>}]} {
    %c0 = arith.constant 0 : index
    %c0_0 = arith.constant 0 : index
    %0 = vector.load %arg1[%c0, %c0_0] : memref<32x32xf32, #tpu.memory_space<vmem>>, vector<32x32xf32>
    %c0_1 = arith.constant 0 : index
    %c0_2 = arith.constant 0 : index
    %1 = vector.load %arg2[%c0_1, %c0_2] : memref<32x32xf32, #tpu.memory_space<vmem>>, vector<32x32xf32>
    %2 = arith.addf %0, %1 : vector<32x32xf32>
    %c0_3 = arith.constant 0 : index
    %c0_4 = arith.constant 0 : index
    %3 = vector.load %arg5[%c0_3, %c0_4] : memref<32x32xf32, #tpu.memory_space<vmem>>, vector<32x32xf32>
    %cst = arith.constant dense<0.000000e+00> : vector<32x32xf32>
    %4 = tpu.matmul %2, %3, %cst {dimension_numbers = #tpu.dot_dimension_numbers<[1], [0], [0], [1], [0, 0, 1, 1], [], []>} : vector<32x32xf32>, vector<32x32xf32>, vector<32x32xf32> -> vector<32x32xf32>
    %cst_5 = arith.constant 0.353553385 : f32
    %5 = vector.broadcast %cst_5 : f32 to vector<32x32xf32>
    %6 = arith.mulf %4, %5 : vector<32x32xf32>
    %c0_6 = arith.constant 0 : index
    %c0_7 = arith.constant 0 : index
    %7 = vector.load %arg3[%c0_6, %c0_7] : memref<128x16xf32, #tpu.memory_space<vmem>>, vector<128x16xf32>
    %c0_8 = arith.constant 0 : index
    %c0_9 = arith.constant 0 : index
    %8 = vector.load %arg6[%c0_8, %c0_9] : memref<16x64xf32, #tpu.memory_space<vmem>>, vector<16x64xf32>
    %cst_10 = arith.constant dense<0.000000e+00> : vector<128x64xf32>
    %9 = tpu.matmul %7, %8, %cst_10 {dimension_numbers = #tpu.dot_dimension_numbers<[1], [0], [0], [1], [0, 0, 1, 1], [], []>} : vector<128x16xf32>, vector<16x64xf32>, vector<128x64xf32> -> vector<128x64xf32>
    %c0_11 = arith.constant 0 : index
    %c0_12 = arith.constant 0 : index
    %10 = vector.load %arg4[%c0_11, %c0_12] : memref<32x64xf32, #tpu.memory_space<vmem>>, vector<32x64xf32>
    %cst_13 = arith.constant 0.000000e+00 : f32
    %11 = vector.broadcast %cst_13 : f32 to vector<32x64xf32>
    %12 = arith.cmpf ogt, %10, %11 : vector<32x64xf32>
    %cst_14 = arith.constant 0.000000e+00 : f32
    %cst_15 = arith.constant -1.000000e+30 : f32
    %13 = vector.broadcast %cst_14 : f32 to vector<32x64xf32>
    %14 = vector.broadcast %cst_15 : f32 to vector<32x64xf32>
    %15 = arith.select %12, %13, %14 : vector<32x64xi1>, vector<32x64xf32>
    %16 = vector.extract_strided_slice %6 {offsets = [0, 0], sizes = [16, 32], strides = [1, 1]} : vector<32x32xf32> to vector<16x32xf32>
    %17 = vector.extract_strided_slice %9 {offsets = [0, 0], sizes = [64, 64], strides = [1, 1]} : vector<128x64xf32> to vector<64x64xf32>
    %18 = vector.extract_strided_slice %15 {offsets = [0, 0], sizes = [16, 64], strides = [1, 1]} : vector<32x64xf32> to vector<16x64xf32>
    %19 = vector.extract_strided_slice %16 {offsets = [0, 0], sizes = [16, 8], strides = [1, 1]} : vector<16x32xf32> to vector<16x8xf32>
    %20 = vector.extract_strided_slice %17 {offsets = [0, 0], sizes = [64, 8], strides = [1, 1]} : vector<64x64xf32> to vector<64x8xf32>
    %21 = vector.extract_strided_slice %17 {offsets = [0, 32], sizes = [64, 8], strides = [1, 1]} : vector<64x64xf32> to vector<64x8xf32>
    %22 = tpu.transpose %20, [1, 0] : vector<64x8xf32> -> vector<8x64xf32>
    %cst_16 = arith.constant dense<0.000000e+00> : vector<16x64xf32>
    %23 = tpu.matmul %19, %22, %cst_16 {dimension_numbers = #tpu.dot_dimension_numbers<[1], [0], [0], [1], [0, 0, 1, 1], [], []>} : vector<16x8xf32>, vector<8x64xf32>, vector<16x64xf32> -> vector<16x64xf32>
    %24 = arith.addf %23, %18 : vector<16x64xf32>
    %cst_17 = arith.constant dense<0xFF800000> : vector<16xf32>
    %25 = vector.multi_reduction <maximumf>, %24, %cst_17 [1] : vector<16x64xf32> to vector<16xf32>
    %26 = vector.shape_cast %25 : vector<16xf32> to vector<16x1xf32>
    %27 = vector.broadcast %26 : vector<16x1xf32> to vector<16x64xf32>
    %28 = arith.subf %24, %27 : vector<16x64xf32>
    %29 = math.exp %28 : vector<16x64xf32>
    %cst_18 = arith.constant dense<0.000000e+00> : vector<16xf32>
    %30 = vector.multi_reduction <add>, %29, %cst_18 [1] : vector<16x64xf32> to vector<16xf32>
    %31 = vector.shape_cast %30 : vector<16xf32> to vector<16x1xf32>
    %32 = tpu.reciprocal %31 {approx = true} : vector<16x1xf32> -> vector<16x1xf32>
    %33 = vector.broadcast %32 : vector<16x1xf32> to vector<16x64xf32>
    %34 = arith.mulf %29, %33 : vector<16x64xf32>
    %cst_19 = arith.constant dense<0.000000e+00> : vector<16x8xf32>
    %35 = tpu.matmul %34, %21, %cst_19 {dimension_numbers = #tpu.dot_dimension_numbers<[1], [0], [0], [1], [0, 0, 1, 1], [], []>} : vector<16x64xf32>, vector<64x8xf32>, vector<16x8xf32> -> vector<16x8xf32>
    %c0_20 = arith.constant 0 : index
    %c0_21 = arith.constant 0 : index
    %36 = vector.load %arg10[%c0_20, %c0_21] : memref<32x32xf32, #tpu.memory_space<vmem>>, vector<16x8xf32>
    tpu.vector_store %arg10[%c0_20, %c0_21], %35 {strides = array<i32>} : memref<32x32xf32, #tpu.memory_space<vmem>>, vector<16x8xf32>,
    %37 = vector.extract_strided_slice %16 {offsets = [0, 8], sizes = [16, 8], strides = [1, 1]} : vector<16x32xf32> to vector<16x8xf32>
    %38 = vector.extract_strided_slice %17 {offsets = [0, 8], sizes = [64, 8], strides = [1, 1]} : vector<64x64xf32> to vector<64x8xf32>
    %39 = vector.extract_strided_slice %17 {offsets = [0, 40], sizes = [64, 8], strides = [1, 1]} : vector<64x64xf32> to vector<64x8xf32>
    %40 = tpu.transpose %38, [1, 0] : vector<64x8xf32> -> vector<8x64xf32>
    %cst_22 = arith.constant dense<0.000000e+00> : vector<16x64xf32>
    %41 = tpu.matmul %37, %40, %cst_22 {dimension_numbers = #tpu.dot_dimension_numbers<[1], [0], [0], [1], [0, 0, 1, 1], [], []>} : vector<16x8xf32>, vector<8x64xf32>, vector<16x64xf32> -> vector<16x64xf32>
    %42 = arith.addf %41, %18 : vector<16x64xf32>
    %cst_23 = arith.constant dense<0xFF800000> : vector<16xf32>
    %43 = vector.multi_reduction <maximumf>, %42, %cst_23 [1] : vector<16x64xf32> to vector<16xf32>
    %44 = vector.shape_cast %43 : vector<16xf32> to vector<16x1xf32>
    %45 = vector.broadcast %44 : vector<16x1xf32> to vector<16x64xf32>
    %46 = arith.subf %42, %45 : vector<16x64xf32>
    %47 = math.exp %46 : vector<16x64xf32>
    %cst_24 = arith.constant dense<0.000000e+00> : vector<16xf32>
    %48 = vector.multi_reduction <add>, %47, %cst_24 [1] : vector<16x64xf32> to vector<16xf32>
    %49 = vector.shape_cast %48 : vector<16xf32> to vector<16x1xf32>
    %50 = tpu.reciprocal %49 {approx = true} : vector<16x1xf32> -> vector<16x1xf32>
    %51 = vector.broadcast %50 : vector<16x1xf32> to vector<16x64xf32>
    %52 = arith.mulf %47, %51 : vector<16x64xf32>
    %cst_25 = arith.constant dense<0.000000e+00> : vector<16x8xf32>
    %53 = tpu.matmul %52, %39, %cst_25 {dimension_numbers = #tpu.dot_dimension_numbers<[1], [0], [0], [1], [0, 0, 1, 1], [], []>} : vector<16x64xf32>, vector<64x8xf32>, vector<16x8xf32> -> vector<16x8xf32>
    %c0_26 = arith.constant 0 : index
    %c8 = arith.constant 8 : index
    %54 = vector.load %arg10[%c0_26, %c8] : memref<32x32xf32, #tpu.memory_space<vmem>>, vector<16x8xf32>
    tpu.vector_store %arg10[%c0_26, %c8], %53 {strides = array<i32>} : memref<32x32xf32, #tpu.memory_space<vmem>>, vector<16x8xf32>,
    %55 = vector.extract_strided_slice %16 {offsets = [0, 16], sizes = [16, 8], strides = [1, 1]} : vector<16x32xf32> to vector<16x8xf32>
    %56 = vector.extract_strided_slice %17 {offsets = [0, 16], sizes = [64, 8], strides = [1, 1]} : vector<64x64xf32> to vector<64x8xf32>
    %57 = vector.extract_strided_slice %17 {offsets = [0, 48], sizes = [64, 8], strides = [1, 1]} : vector<64x64xf32> to vector<64x8xf32>
    %58 = tpu.transpose %56, [1, 0] : vector<64x8xf32> -> vector<8x64xf32>
    %cst_27 = arith.constant dense<0.000000e+00> : vector<16x64xf32>
    %59 = tpu.matmul %55, %58, %cst_27 {dimension_numbers = #tpu.dot_dimension_numbers<[1], [0], [0], [1], [0, 0, 1, 1], [], []>} : vector<16x8xf32>, vector<8x64xf32>, vector<16x64xf32> -> vector<16x64xf32>
    %60 = arith.addf %59, %18 : vector<16x64xf32>
    %cst_28 = arith.constant dense<0xFF800000> : vector<16xf32>
    %61 = vector.multi_reduction <maximumf>, %60, %cst_28 [1] : vector<16x64xf32> to vector<16xf32>
    %62 = vector.shape_cast %61 : vector<16xf32> to vector<16x1xf32>
    %63 = vector.broadcast %62 : vector<16x1xf32> to vector<16x64xf32>
    %64 = arith.subf %60, %63 : vector<16x64xf32>
    %65 = math.exp %64 : vector<16x64xf32>
    %cst_29 = arith.constant dense<0.000000e+00> : vector<16xf32>
    %66 = vector.multi_reduction <add>, %65, %cst_29 [1] : vector<16x64xf32> to vector<16xf32>
    %67 = vector.shape_cast %66 : vector<16xf32> to vector<16x1xf32>
    %68 = tpu.reciprocal %67 {approx = true} : vector<16x1xf32> -> vector<16x1xf32>
    %69 = vector.broadcast %68 : vector<16x1xf32> to vector<16x64xf32>
    %70 = arith.mulf %65, %69 : vector<16x64xf32>
    %cst_30 = arith.constant dense<0.000000e+00> : vector<16x8xf32>
    %71 = tpu.matmul %70, %57, %cst_30 {dimension_numbers = #tpu.dot_dimension_numbers<[1], [0], [0], [1], [0, 0, 1, 1], [], []>} : vector<16x64xf32>, vector<64x8xf32>, vector<16x8xf32> -> vector<16x8xf32>
    %c0_31 = arith.constant 0 : index
    %c16 = arith.constant 16 : index
    %72 = vector.load %arg10[%c0_31, %c16] : memref<32x32xf32, #tpu.memory_space<vmem>>, vector<16x8xf32>
    tpu.vector_store %arg10[%c0_31, %c16], %71 {strides = array<i32>} : memref<32x32xf32, #tpu.memory_space<vmem>>, vector<16x8xf32>,
    %73 = vector.extract_strided_slice %16 {offsets = [0, 24], sizes = [16, 8], strides = [1, 1]} : vector<16x32xf32> to vector<16x8xf32>
    %74 = vector.extract_strided_slice %17 {offsets = [0, 24], sizes = [64, 8], strides = [1, 1]} : vector<64x64xf32> to vector<64x8xf32>
    %75 = vector.extract_strided_slice %17 {offsets = [0, 56], sizes = [64, 8], strides = [1, 1]} : vector<64x64xf32> to vector<64x8xf32>
    %76 = tpu.transpose %74, [1, 0] : vector<64x8xf32> -> vector<8x64xf32>
    %cst_32 = arith.constant dense<0.000000e+00> : vector<16x64xf32>
    %77 = tpu.matmul %73, %76, %cst_32 {dimension_numbers = #tpu.dot_dimension_numbers<[1], [0], [0], [1], [0, 0, 1, 1], [], []>} : vector<16x8xf32>, vector<8x64xf32>, vector<16x64xf32> -> vector<16x64xf32>
    %78 = arith.addf %77, %18 : vector<16x64xf32>
    %cst_33 = arith.constant dense<0xFF800000> : vector<16xf32>
    %79 = vector.multi_reduction <maximumf>, %78, %cst_33 [1] : vector<16x64xf32> to vector<16xf32>
    %80 = vector.shape_cast %79 : vector<16xf32> to vector<16x1xf32>
    %81 = vector.broadcast %80 : vector<16x1xf32> to vector<16x64xf32>
    %82 = arith.subf %78, %81 : vector<16x64xf32>
    %83 = math.exp %82 : vector<16x64xf32>
    %cst_34 = arith.constant dense<0.000000e+00> : vector<16xf32>
    %84 = vector.multi_reduction <add>, %83, %cst_34 [1] : vector<16x64xf32> to vector<16xf32>
    %85 = vector.shape_cast %84 : vector<16xf32> to vector<16x1xf32>
    %86 = tpu.reciprocal %85 {approx = true} : vector<16x1xf32> -> vector<16x1xf32>
    %87 = vector.broadcast %86 : vector<16x1xf32> to vector<16x64xf32>
    %88 = arith.mulf %83, %87 : vector<16x64xf32>
    %cst_35 = arith.constant dense<0.000000e+00> : vector<16x8xf32>
    %89 = tpu.matmul %88, %75, %cst_35 {dimension_numbers = #tpu.dot_dimension_numbers<[1], [0], [0], [1], [0, 0, 1, 1], [], []>} : vector<16x64xf32>, vector<64x8xf32>, vector<16x8xf32> -> vector<16x8xf32>
    %c0_36 = arith.constant 0 : index
    %c24 = arith.constant 24 : index
    %90 = vector.load %arg10[%c0_36, %c24] : memref<32x32xf32, #tpu.memory_space<vmem>>, vector<16x8xf32>
    tpu.vector_store %arg10[%c0_36, %c24], %89 {strides = array<i32>} : memref<32x32xf32, #tpu.memory_space<vmem>>, vector<16x8xf32>,
    %91 = vector.extract_strided_slice %6 {offsets = [16, 0], sizes = [16, 32], strides = [1, 1]} : vector<32x32xf32> to vector<16x32xf32>
    %92 = vector.extract_strided_slice %9 {offsets = [64, 0], sizes = [64, 64], strides = [1, 1]} : vector<128x64xf32> to vector<64x64xf32>
    %93 = vector.extract_strided_slice %15 {offsets = [16, 0], sizes = [16, 64], strides = [1, 1]} : vector<32x64xf32> to vector<16x64xf32>
    %94 = vector.extract_strided_slice %91 {offsets = [0, 0], sizes = [16, 8], strides = [1, 1]} : vector<16x32xf32> to vector<16x8xf32>
    %95 = vector.extract_strided_slice %92 {offsets = [0, 0], sizes = [64, 8], strides = [1, 1]} : vector<64x64xf32> to vector<64x8xf32>
    %96 = vector.extract_strided_slice %92 {offsets = [0, 32], sizes = [64, 8], strides = [1, 1]} : vector<64x64xf32> to vector<64x8xf32>
    %97 = tpu.transpose %95, [1, 0] : vector<64x8xf32> -> vector<8x64xf32>
    %cst_37 = arith.constant dense<0.000000e+00> : vector<16x64xf32>
    %98 = tpu.matmul %94, %97, %cst_37 {dimension_numbers = #tpu.dot_dimension_numbers<[1], [0], [0], [1], [0, 0, 1, 1], [], []>} : vector<16x8xf32>, vector<8x64xf32>, vector<16x64xf32> -> vector<16x64xf32>
    %99 = arith.addf %98, %93 : vector<16x64xf32>
    %cst_38 = arith.constant dense<0xFF800000> : vector<16xf32>
    %100 = vector.multi_reduction <maximumf>, %99, %cst_38 [1] : vector<16x64xf32> to vector<16xf32>
    %101 = vector.shape_cast %100 : vector<16xf32> to vector<16x1xf32>
    %102 = vector.broadcast %101 : vector<16x1xf32> to vector<16x64xf32>
    %103 = arith.subf %99, %102 : vector<16x64xf32>
    %104 = math.exp %103 : vector<16x64xf32>
    %cst_39 = arith.constant dense<0.000000e+00> : vector<16xf32>
    %105 = vector.multi_reduction <add>, %104, %cst_39 [1] : vector<16x64xf32> to vector<16xf32>
    %106 = vector.shape_cast %105 : vector<16xf32> to vector<16x1xf32>
    %107 = tpu.reciprocal %106 {approx = true} : vector<16x1xf32> -> vector<16x1xf32>
    %108 = vector.broadcast %107 : vector<16x1xf32> to vector<16x64xf32>
    %109 = arith.mulf %104, %108 : vector<16x64xf32>
    %cst_40 = arith.constant dense<0.000000e+00> : vector<16x8xf32>
    %110 = tpu.matmul %109, %96, %cst_40 {dimension_numbers = #tpu.dot_dimension_numbers<[1], [0], [0], [1], [0, 0, 1, 1], [], []>} : vector<16x64xf32>, vector<64x8xf32>, vector<16x8xf32> -> vector<16x8xf32>
    %c16_41 = arith.constant 16 : index
    %c0_42 = arith.constant 0 : index
    %111 = vector.load %arg10[%c16_41, %c0_42] : memref<32x32xf32, #tpu.memory_space<vmem>>, vector<16x8xf32>
    tpu.vector_store %arg10[%c16_41, %c0_42], %110 {strides = array<i32>} : memref<32x32xf32, #tpu.memory_space<vmem>>, vector<16x8xf32>,
    %112 = vector.extract_strided_slice %91 {offsets = [0, 8], sizes = [16, 8], strides = [1, 1]} : vector<16x32xf32> to vector<16x8xf32>
    %113 = vector.extract_strided_slice %92 {offsets = [0, 8], sizes = [64, 8], strides = [1, 1]} : vector<64x64xf32> to vector<64x8xf32>
    %114 = vector.extract_strided_slice %92 {offsets = [0, 40], sizes = [64, 8], strides = [1, 1]} : vector<64x64xf32> to vector<64x8xf32>
    %115 = tpu.transpose %113, [1, 0] : vector<64x8xf32> -> vector<8x64xf32>
    %cst_43 = arith.constant dense<0.000000e+00> : vector<16x64xf32>
    %116 = tpu.matmul %112, %115, %cst_43 {dimension_numbers = #tpu.dot_dimension_numbers<[1], [0], [0], [1], [0, 0, 1, 1], [], []>} : vector<16x8xf32>, vector<8x64xf32>, vector<16x64xf32> -> vector<16x64xf32>
    %117 = arith.addf %116, %93 : vector<16x64xf32>
    %cst_44 = arith.constant dense<0xFF800000> : vector<16xf32>
    %118 = vector.multi_reduction <maximumf>, %117, %cst_44 [1] : vector<16x64xf32> to vector<16xf32>
    %119 = vector.shape_cast %118 : vector<16xf32> to vector<16x1xf32>
    %120 = vector.broadcast %119 : vector<16x1xf32> to vector<16x64xf32>
    %121 = arith.subf %117, %120 : vector<16x64xf32>
    %122 = math.exp %121 : vector<16x64xf32>
    %cst_45 = arith.constant dense<0.000000e+00> : vector<16xf32>
    %123 = vector.multi_reduction <add>, %122, %cst_45 [1] : vector<16x64xf32> to vector<16xf32>
    %124 = vector.shape_cast %123 : vector<16xf32> to vector<16x1xf32>
    %125 = tpu.reciprocal %124 {approx = true} : vector<16x1xf32> -> vector<16x1xf32>
    %126 = vector.broadcast %125 : vector<16x1xf32> to vector<16x64xf32>
    %127 = arith.mulf %122, %126 : vector<16x64xf32>
    %cst_46 = arith.constant dense<0.000000e+00> : vector<16x8xf32>
    %128 = tpu.matmul %127, %114, %cst_46 {dimension_numbers = #tpu.dot_dimension_numbers<[1], [0], [0], [1], [0, 0, 1, 1], [], []>} : vector<16x64xf32>, vector<64x8xf32>, vector<16x8xf32> -> vector<16x8xf32>
    %c16_47 = arith.constant 16 : index
    %c8_48 = arith.constant 8 : index
    %129 = vector.load %arg10[%c16_47, %c8_48] : memref<32x32xf32, #tpu.memory_space<vmem>>, vector<16x8xf32>
    tpu.vector_store %arg10[%c16_47, %c8_48], %128 {strides = array<i32>} : memref<32x32xf32, #tpu.memory_space<vmem>>, vector<16x8xf32>,
    %130 = vector.extract_strided_slice %91 {offsets = [0, 16], sizes = [16, 8], strides = [1, 1]} : vector<16x32xf32> to vector<16x8xf32>
    %131 = vector.extract_strided_slice %92 {offsets = [0, 16], sizes = [64, 8], strides = [1, 1]} : vector<64x64xf32> to vector<64x8xf32>
    %132 = vector.extract_strided_slice %92 {offsets = [0, 48], sizes = [64, 8], strides = [1, 1]} : vector<64x64xf32> to vector<64x8xf32>
    %133 = tpu.transpose %131, [1, 0] : vector<64x8xf32> -> vector<8x64xf32>
    %cst_49 = arith.constant dense<0.000000e+00> : vector<16x64xf32>
    %134 = tpu.matmul %130, %133, %cst_49 {dimension_numbers = #tpu.dot_dimension_numbers<[1], [0], [0], [1], [0, 0, 1, 1], [], []>} : vector<16x8xf32>, vector<8x64xf32>, vector<16x64xf32> -> vector<16x64xf32>
    %135 = arith.addf %134, %93 : vector<16x64xf32>
    %cst_50 = arith.constant dense<0xFF800000> : vector<16xf32>
    %136 = vector.multi_reduction <maximumf>, %135, %cst_50 [1] : vector<16x64xf32> to vector<16xf32>
    %137 = vector.shape_cast %136 : vector<16xf32> to vector<16x1xf32>
    %138 = vector.broadcast %137 : vector<16x1xf32> to vector<16x64xf32>
    %139 = arith.subf %135, %138 : vector<16x64xf32>
    %140 = math.exp %139 : vector<16x64xf32>
    %cst_51 = arith.constant dense<0.000000e+00> : vector<16xf32>
    %141 = vector.multi_reduction <add>, %140, %cst_51 [1] : vector<16x64xf32> to vector<16xf32>
    %142 = vector.shape_cast %141 : vector<16xf32> to vector<16x1xf32>
    %143 = tpu.reciprocal %142 {approx = true} : vector<16x1xf32> -> vector<16x1xf32>
    %144 = vector.broadcast %143 : vector<16x1xf32> to vector<16x64xf32>
    %145 = arith.mulf %140, %144 : vector<16x64xf32>
    %cst_52 = arith.constant dense<0.000000e+00> : vector<16x8xf32>
    %146 = tpu.matmul %145, %132, %cst_52 {dimension_numbers = #tpu.dot_dimension_numbers<[1], [0], [0], [1], [0, 0, 1, 1], [], []>} : vector<16x64xf32>, vector<64x8xf32>, vector<16x8xf32> -> vector<16x8xf32>
    %c16_53 = arith.constant 16 : index
    %c16_54 = arith.constant 16 : index
    %147 = vector.load %arg10[%c16_53, %c16_54] : memref<32x32xf32, #tpu.memory_space<vmem>>, vector<16x8xf32>
    tpu.vector_store %arg10[%c16_53, %c16_54], %146 {strides = array<i32>} : memref<32x32xf32, #tpu.memory_space<vmem>>, vector<16x8xf32>,
    %148 = vector.extract_strided_slice %91 {offsets = [0, 24], sizes = [16, 8], strides = [1, 1]} : vector<16x32xf32> to vector<16x8xf32>
    %149 = vector.extract_strided_slice %92 {offsets = [0, 24], sizes = [64, 8], strides = [1, 1]} : vector<64x64xf32> to vector<64x8xf32>
    %150 = vector.extract_strided_slice %92 {offsets = [0, 56], sizes = [64, 8], strides = [1, 1]} : vector<64x64xf32> to vector<64x8xf32>
    %151 = tpu.transpose %149, [1, 0] : vector<64x8xf32> -> vector<8x64xf32>
    %cst_55 = arith.constant dense<0.000000e+00> : vector<16x64xf32>
    %152 = tpu.matmul %148, %151, %cst_55 {dimension_numbers = #tpu.dot_dimension_numbers<[1], [0], [0], [1], [0, 0, 1, 1], [], []>} : vector<16x8xf32>, vector<8x64xf32>, vector<16x64xf32> -> vector<16x64xf32>
    %153 = arith.addf %152, %93 : vector<16x64xf32>
    %cst_56 = arith.constant dense<0xFF800000> : vector<16xf32>
    %154 = vector.multi_reduction <maximumf>, %153, %cst_56 [1] : vector<16x64xf32> to vector<16xf32>
    %155 = vector.shape_cast %154 : vector<16xf32> to vector<16x1xf32>
    %156 = vector.broadcast %155 : vector<16x1xf32> to vector<16x64xf32>
    %157 = arith.subf %153, %156 : vector<16x64xf32>
    %158 = math.exp %157 : vector<16x64xf32>
    %cst_57 = arith.constant dense<0.000000e+00> : vector<16xf32>
    %159 = vector.multi_reduction <add>, %158, %cst_57 [1] : vector<16x64xf32> to vector<16xf32>
    %160 = vector.shape_cast %159 : vector<16xf32> to vector<16x1xf32>
    %161 = tpu.reciprocal %160 {approx = true} : vector<16x1xf32> -> vector<16x1xf32>
    %162 = vector.broadcast %161 : vector<16x1xf32> to vector<16x64xf32>
    %163 = arith.mulf %158, %162 : vector<16x64xf32>
    %cst_58 = arith.constant dense<0.000000e+00> : vector<16x8xf32>
    %164 = tpu.matmul %163, %150, %cst_58 {dimension_numbers = #tpu.dot_dimension_numbers<[1], [0], [0], [1], [0, 0, 1, 1], [], []>} : vector<16x64xf32>, vector<64x8xf32>, vector<16x8xf32> -> vector<16x8xf32>
    %c16_59 = arith.constant 16 : index
    %c24_60 = arith.constant 24 : index
    %165 = vector.load %arg10[%c16_59, %c24_60] : memref<32x32xf32, #tpu.memory_space<vmem>>, vector<16x8xf32>
    tpu.vector_store %arg10[%c16_59, %c24_60], %164 {strides = array<i32>} : memref<32x32xf32, #tpu.memory_space<vmem>>, vector<16x8xf32>,
    %c0_61 = arith.constant 0 : index
    %c0_62 = arith.constant 0 : index
    %166 = vector.load %arg10[%c0_61, %c0_62] : memref<32x32xf32, #tpu.memory_space<vmem>>, vector<32x32xf32>
    %c0_63 = arith.constant 0 : index
    %c0_64 = arith.constant 0 : index
    %167 = vector.load %arg7[%c0_63, %c0_64] : memref<32x32xf32, #tpu.memory_space<vmem>>, vector<32x32xf32>
    %cst_65 = arith.constant dense<0.000000e+00> : vector<32x32xf32>
    %168 = tpu.matmul %166, %167, %cst_65 {dimension_numbers = #tpu.dot_dimension_numbers<[1], [0], [0], [1], [0, 0, 1, 1], [], []>} : vector<32x32xf32>, vector<32x32xf32>, vector<32x32xf32> -> vector<32x32xf32>
    %c0_66 = arith.constant 0 : index
    %c0_67 = arith.constant 0 : index
    %169 = vector.load %arg8[%c0_66, %c0_67] : memref<1x32xf32, #tpu.memory_space<vmem>>, vector<1x32xf32>
    %170 = vector.broadcast %169 : vector<1x32xf32> to vector<32x32xf32>
    %171 = arith.addf %168, %170 : vector<32x32xf32>
    %c0_68 = arith.constant 0 : index
    %c0_69 = arith.constant 0 : index
    %172 = vector.load %arg9[%c0_68, %c0_69] : memref<32x32xf32, #tpu.memory_space<vmem>>, vector<32x32xf32>
    tpu.vector_store %arg9[%c0_68, %c0_69], %171 {strides = array<i32>} : memref<32x32xf32, #tpu.memory_space<vmem>>, vector<32x32xf32>,
    return
  }
  func.func @transform_0(%arg0: i32) -> (i32, i32) {
    %c0_i32 = arith.constant 0 : i32
    %c0_i32_0 = arith.constant 0 : i32
    %c0_i32_1 = arith.constant 0 : i32
    return %c0_i32, %c0_i32_0 : i32, i32
  }
  func.func @transform_1(%arg0: i32) -> (i32, i32) {
    %c0_i32 = arith.constant 0 : i32
    %c0_i32_0 = arith.constant 0 : i32
    %c0_i32_1 = arith.constant 0 : i32
    return %c0_i32, %c0_i32_0 : i32, i32
  }
  func.func @transform_2(%arg0: i32) -> (i32, i32) {
    %c0_i32 = arith.constant 0 : i32
    %c0_i32_0 = arith.constant 0 : i32
    %c0_i32_1 = arith.constant 0 : i32
    return %c0_i32, %c0_i32_0 : i32, i32
  }
  func.func @transform_3(%arg0: i32) -> (i32, i32) {
    %c0_i32 = arith.constant 0 : i32
    %c0_i32_0 = arith.constant 0 : i32
    %c0_i32_1 = arith.constant 0 : i32
    return %c0_i32, %c0_i32_0 : i32, i32
  }
  func.func @transform_4(%arg0: i32) -> (i32, i32) {
    %c0_i32 = arith.constant 0 : i32
    %c0_i32_0 = arith.constant 0 : i32
    %c0_i32_1 = arith.constant 0 : i32
    return %c0_i32, %c0_i32_0 : i32, i32
  }
  func.func @transform_5(%arg0: i32) -> (i32, i32) {
    %c0_i32 = arith.constant 0 : i32
    %c0_i32_0 = arith.constant 0 : i32
    %c0_i32_1 = arith.constant 0 : i32
    return %c0_i32, %c0_i32_0 : i32, i32
  }
  func.func @transform_6(%arg0: i32) -> (i32, i32) {
    %c0_i32 = arith.constant 0 : i32
    %c0_i32_0 = arith.constant 0 : i32
    %c0_i32_1 = arith.constant 0 : i32
    return %c0_i32, %c0_i32_0 : i32, i32
  }
  func.func @transform_7(%arg0: i32) -> (i32, i32) {
    %c0_i32 = arith.constant 0 : i32
    %c0_i32_0 = arith.constant 0 : i32
    %c0_i32_1 = arith.constant 0 : i32
    return %c0_i32, %c0_i32_0 : i32, i32
  }
  func.func @transform_8(%arg0: i32) -> (i32, i32) {
    %c0_i32 = arith.constant 0 : i32
    %c0_i32_0 = arith.constant 0 : i32
    %c0_i32_1 = arith.constant 0 : i32
    return %c0_i32, %c0_i32_0 : i32, i32
  }
}

</mosaic_0001>

<llo_original>
// kernel: tpu_custom_call.1
$region0: #{tpu_custom_call.1}
  #allocation0 [shape = 'u32[]', space=smem, size = 0x4, offset = 0x4, fixed_abs, tag = 'smem constant byte address 0x4 - core index']
  #allocation1 [shape = 'u32[144,128]{1,0:T(1,128)}', space=vmem, size = 0x12000, scoped, tag = 'internal scratch']
  #allocation2 [shape = 'f32[32,32]{1,0:T(8,128)}', space=vmem, size = 0x4000, scoped, tag = 'scratch operand']
  %s0 = inlined_call_operand.vmem [shape: f32[32,32], index: 0, kind: input, shape index: {}]
  %s1 = inlined_call_operand.vmem [shape: f32[32,32], index: 1, kind: input, shape index: {}]
  %s2 = inlined_call_operand.vmem [shape: f32[128,16], index: 2, kind: input, shape index: {}]
  %s3 = inlined_call_operand.vmem [shape: f32[32,64], index: 3, kind: input, shape index: {}]
  %s4 = inlined_call_operand.vmem [shape: f32[32,32], index: 4, kind: input, shape index: {}]
  %s5 = inlined_call_operand.vmem [shape: f32[16,64], index: 5, kind: input, shape index: {}]
  %s6 = inlined_call_operand.hbm [shape: f32[32,32], index: 6, kind: input, shape index: {}]
  %s7 = inlined_call_operand.vmem [shape: f32[1,32], index: 7, kind: input, shape index: {}]
  %s8 = inlined_call_operand.hbm [shape: f32[32,32], index: 8, kind: output, shape index: {}]
  %s9 = sld [smem:[#allocation0]]
  $region46: #{tpu_custom_call.1} parent=0
    _
  %s11 = ssub.s32 1, %s9
  %s12 = scalar_select 0, %s11, %s9
  $region1: #{tpu_custom_call.1} parent=0
    #allocation3 [shape = 'u8[16384]{0}', space=vmem, size = 0x4000, scoped, tag = 'input window, operand 6, single buffered']
    #allocation4 [shape = 's32[1]{0}', space=sflag, size = 0x4, scoped, tag = 'scoped memory for tpu_custom_call.1']
    #allocation5 [shape = 's32[1]{0}', space=sflag, size = 0x4, scoped, tag = 'scoped memory for tpu_custom_call.1']
    #allocation6 [shape = 'u8[16384]{0}', space=vmem, size = 0x4000, scoped, tag = 'output window, operand 0, single buffered']
    %13 = vsyncpa [#allocation4], 0
    %14 = vsyncpa [#allocation5], 0
    // Predicated region
    $region2: #{tpu_custom_call.1} parent=1 // pred_check
      _
    $region3: #{tpu_custom_call.1} parent=1 // pred_check_branch
      %16 = sbr.rel (0) target = $region5
    $region4: #{tpu_custom_call.1} parent=1 // pred_region
      _
    $region5: #{tpu_custom_call.1} parent=1 // pred_fallthru
      _
    // Predicated region
    $region6: #{tpu_custom_call.1} parent=1 // pred_check
      _
    $region7: #{tpu_custom_call.1} parent=1 // pred_check_branch
      %18 = sbr.rel (0) target = $region9
    $region8: #{tpu_custom_call.1} parent=1 // pred_region
      _
    $region9: #{tpu_custom_call.1} parent=1 // pred_fallthru
      _
    // Predicated region
    $region10: #{tpu_custom_call.1} parent=1 // pred_check
      _
    $region11: #{tpu_custom_call.1} parent=1 // pred_check_branch
      %20 = sbr.rel (0) target = $region13
    $region12: #{tpu_custom_call.1} parent=1 // pred_region
      _
    $region13: #{tpu_custom_call.1} parent=1 // pred_fallthru
      _
    // Predicated region
    $region14: #{tpu_custom_call.1} parent=1 // pred_check
      _
    $region15: #{tpu_custom_call.1} parent=1 // pred_check_branch
      %22 = sbr.rel (0) target = $region17
    $region16: #{tpu_custom_call.1} parent=1 // pred_region
      _
    $region17: #{tpu_custom_call.1} parent=1 // pred_fallthru
      _
    // Predicated region
    $region18: #{tpu_custom_call.1} parent=1 // pred_check
      _
    $region19: #{tpu_custom_call.1} parent=1 // pred_check_branch
      %24 = sbr.rel (0) target = $region21
    $region20: #{tpu_custom_call.1} parent=1 // pred_region
      _
    $region21: #{tpu_custom_call.1} parent=1 // pred_fallthru
      _
    // Predicated region
    $region22: #{tpu_custom_call.1} parent=1 // pred_check
      _
    $region23: #{tpu_custom_call.1} parent=1 // pred_check_branch
      %26 = sbr.rel (0) target = $region25
    $region24: #{tpu_custom_call.1} parent=1 // pred_region
      _
    $region25: #{tpu_custom_call.1} parent=1 // pred_fallthru
      _
    // Predicated region
    $region26: #{tpu_custom_call.1} parent=1 // pred_check
      _
    $region27: #{tpu_custom_call.1} parent=1 // pred_check_branch
      %28 = sbr.rel (0) target = $region29
    $region28: #{tpu_custom_call.1} parent=1 // pred_region
      %s30 = ssub.s32 512, 512
      %31 = vsyncadd [#allocation4], %s30
      %s32 = sshll.u32 [#allocation3], 4
      %s33 = int_to_ptr.vmem [resolvable:$true] %s32
      %38 = dma.hbm_to_vmem [thread:$0]  %s6, 512, %s33, [#allocation4], 128, 128, 8
    $region29: #{tpu_custom_call.1} parent=1 // pred_fallthru
      _
    // Predicated region
    $region30: #{tpu_custom_call.1} parent=1 // pred_check
      _
    $region31: #{tpu_custom_call.1} parent=1 // pred_check_branch
      %40 = sbr.rel (0) target = $region33
    $region32: #{tpu_custom_call.1} parent=1 // pred_region
      _
    $region33: #{tpu_custom_call.1} parent=1 // pred_fallthru
      _
    // Predicated region
    $region34: #{tpu_custom_call.1} parent=1 // pred_check
      _
    $region35: #{tpu_custom_call.1} parent=1 // pred_check_branch
      %42 = sbr.rel (0) target = $region37
    $region36: #{tpu_custom_call.1} parent=1 // pred_region
      %43 = dma.done [#allocation4], 512
    $region37: #{tpu_custom_call.1} parent=1 // pred_fallthru
      _
    %v44 = vld [vmem:[%s0] sm:$0xff]
    %v45 = vld [vmem:[%s0 + $0x8] sm:$0xff]
    %v46 = vld [vmem:[%s0 + $0x10] sm:$0xff]
    %v47 = vld [vmem:[%s0 + $0x18] sm:$0xff]
    %v48 = vld [vmem:[%s1] sm:$0xff]
    %v49 = vld [vmem:[%s1 + $0x8] sm:$0xff]
    %v50 = vld [vmem:[%s1 + $0x10] sm:$0xff]
    %v51 = vld [vmem:[%s1 + $0x18] sm:$0xff]
    %v52 = vadd.f32 %v44, %v48
    %v53 = vadd.f32 %v45, %v49
    %v54 = vadd.f32 %v46, %v50
    %v55 = vadd.f32 %v47, %v51
    %v56 = vld [vmem:[%s4] sm:$0xff]
    %v57 = vld [vmem:[%s4 + $0x8] sm:$0xff]
    %v58 = vld [vmem:[%s4 + $0x10] sm:$0xff]
    %v59 = vld [vmem:[%s4 + $0x18] sm:$0xff]
    %vm60 = vcmask 261120
    %v62 = vsel %vm60, %v52, 0
    %v65 = vsel %vm60, %v53, 0
    %v68 = vsel %vm60, %v54, 0
    %v71 = vsel %vm60, %v55, 0
    %73 = vmatprep.subr.mxu0 0.0
    %74 = vmatpush1.msra.mxu0 0.0
    %75 = vmatprep.subr.mxu0 0.0
    %76 = vmatpush1.msra.mxu0 0.0
    %77 = vmatprep.subr.mxu0 0.0
    %78 = vmatpush1.msra.mxu0 0.0
    %79 = vmatprep.subr.mxu0 0.0
    %80 = vmatpush1.msra.mxu0 0.0
    %81 = vmatprep.subr.mxu0 0.0
    %82 = vmatpush1.msra.mxu0 0.0
    %83 = vmatprep.subr.mxu0 0.0
    %84 = vmatpush1.msra.mxu0 0.0
    %85 = vmatprep.subr.mxu0 0.0
    %86 = vmatpush1.msra.mxu0 0.0
    %87 = vmatprep.subr.mxu0 0.0
    %88 = vmatpush1.msra.mxu0 0.0
    %89 = vmatprep.subr.mxu0 0.0
    %90 = vmatpush1.msra.mxu0 0.0
    %91 = vmatprep.subr.mxu0 0.0
    %92 = vmatpush1.msra.mxu0 0.0
    %93 = vmatprep.subr.mxu0 0.0
    %94 = vmatpush1.msra.mxu0 0.0
    %95 = vmatprep.subr.mxu0 0.0
    %96 = vmatpush1.msra.mxu0 0.0
    %97 = vmatprep.subr.mxu0 0.0
    %98 = vmatpush1.msra.mxu0 %v59
    %99 = vmatprep.subr.mxu0 0.0
    %100 = vmatpush1.msra.mxu0 %v58
    %101 = vmatprep.subr.mxu0 0.0
    %102 = vmatpush1.msra.mxu0 %v57
    %103 = vmatprep.subr.mxu0 0.0
    %104 = vmatpush1.msra.mxu0 %v56
    %105 = vmatprep.subr.mxu0 0.0
    %106 = vmatpush2.msra.mxu0 0.0
    %107 = vmatprep.subr.mxu0 0.0
    %108 = vmatpush2.msra.mxu0 0.0
    %109 = vmatprep.subr.mxu0 0.0
    %110 = vmatpush2.msra.mxu0 0.0
    %111 = vmatprep.subr.mxu0 0.0
    %112 = vmatpush2.msra.mxu0 0.0
    %113 = vmatprep.subr.mxu0 0.0
    %114 = vmatpush2.msra.mxu0 0.0
    %115 = vmatprep.subr.mxu0 0.0
    %116 = vmatpush2.msra.mxu0 0.0
    %117 = vmatprep.subr.mxu0 0.0
    %118 = vmatpush2.msra.mxu0 0.0
    %119 = vmatprep.subr.mxu0 0.0
    %120 = vmatpush2.msra.mxu0 0.0
    %121 = vmatprep.subr.mxu0 0.0
    %122 = vmatpush2.msra.mxu0 0.0
    %123 = vmatprep.subr.mxu0 0.0
    %124 = vmatpush2.msra.mxu0 0.0
    %125 = vmatprep.subr.mxu0 0.0
    %126 = vmatpush2.msra.mxu0 0.0
    %127 = vmatprep.subr.mxu0 0.0
    %128 = vmatpush2.msra.mxu0 0.0
    %129 = vmatprep.subr.mxu0 0.0
    %130 = vmatpush2.msra.mxu0 0.0
    %131 = vmatprep.subr.mxu0 0.0
    %132 = vmatpush2.msra.mxu0 0.0
    %133 = vmatprep.subr.mxu0 0.0
    %134 = vmatpush2.msra.mxu0 0.0
    %135 = vmatprep.subr.mxu0 0.0
    %136 = vmatpush2.msra.mxu0 0.0
    %137 = vmatprep.mubr.f32.mxu0 0.0
    %138 = vmatmul.mubr.f32.gmra.mxu0 %v62
    %v139 = vpop.f32.mrf.mxu0
    %v140 = vadd.f32 0.0, %v139
    %v141 = vpop.f32.mrf.mxu0
    %142 = vmatprep.mubr.f32.mxu0 0.0
    %143 = vmatmul.mubr.f32.gmra.mxu0 %v65
    %v144 = vpop.f32.mrf.mxu0
    %v145 = vadd.f32 0.0, %v144
    %v146 = vpop.f32.mrf.mxu0
    %147 = vmatprep.mubr.f32.mxu0 0.0
    %148 = vmatmul.mubr.f32.gmra.mxu0 %v68
    %v149 = vpop.f32.mrf.mxu0
    %v150 = vadd.f32 0.0, %v149
    %v151 = vpop.f32.mrf.mxu0
    %152 = vmatprep.mubr.f32.mxu0 0.0
    %153 = vmatmul.mubr.f32.gmra.mxu0 %v71
    %v154 = vpop.f32.mrf.mxu0
    %v155 = vadd.f32 0.0, %v154
    %v156 = vpop.f32.mrf.mxu0
    %157 = vdwg.mxu0
    %v158 = vmul.f32 %v140, 0.35355338
    %v159 = vmul.f32 %v145, 0.35355338
    %v160 = vmul.f32 %v150, 0.35355338
    %v161 = vmul.f32 %v155, 0.35355338
    %v162 = vld [vmem:[%s2] sm:$0xff]
    %v163 = vld [vmem:[%s2 + $0x8] sm:$0xff]
    %v164 = vld [vmem:[%s2 + $0x10] sm:$0xff]
    %v165 = vld [vmem:[%s2 + $0x18] sm:$0xff]
    %v166 = vld [vmem:[%s2 + $0x20] sm:$0xff]
    %v167 = vld [vmem:[%s2 + $0x28] sm:$0xff]
    %v168 = vld [vmem:[%s2 + $0x30] sm:$0xff]
    %v169 = vld [vmem:[%s2 + $0x38] sm:$0xff]
    %v170 = vld [vmem:[%s2 + $0x40] sm:$0xff]
    %v171 = vld [vmem:[%s2 + $0x48] sm:$0xff]
    %v172 = vld [vmem:[%s2 + $0x50] sm:$0xff]
    %v173 = vld [vmem:[%s2 + $0x58] sm:$0xff]
    %v174 = vld [vmem:[%s2 + $0x60] sm:$0xff]
    %v175 = vld [vmem:[%s2 + $0x68] sm:$0xff]
    %v176 = vld [vmem:[%s2 + $0x70] sm:$0xff]
    %v177 = vld [vmem:[%s2 + $0x78] sm:$0xff]
    %v178 = vld [vmem:[%s5] sm:$0xff]
    %v179 = vld [vmem:[%s5 + $0x8] sm:$0xff]
    %vm180 = vcmask 130048
    %v182 = vsel %vm180, %v162, 0
    %v185 = vsel %vm180, %v163, 0
    %v188 = vsel %vm180, %v164, 0
    %v191 = vsel %vm180, %v165, 0
    %v194 = vsel %vm180, %v166, 0
    %v197 = vsel %vm180, %v167, 0
    %v200 = vsel %vm180, %v168, 0
    %v203 = vsel %vm180, %v169, 0
    %v206 = vsel %vm180, %v170, 0
    %v209 = vsel %vm180, %v171, 0
    %v212 = vsel %vm180, %v172, 0
    %v215 = vsel %vm180, %v173, 0
    %v218 = vsel %vm180, %v174, 0
    %v221 = vsel %vm180, %v175, 0
    %v224 = vsel %vm180, %v176, 0
    %v227 = vsel %vm180, %v177, 0
    %229 = vmatprep.subr.mxu0 0.0
    %230 = vmatpush1.msra.mxu0 0.0
    %231 = vmatprep.subr.mxu0 0.0
    %232 = vmatpush1.msra.mxu0 0.0
    %233 = vmatprep.subr.mxu0 0.0
    %234 = vmatpush1.msra.mxu0 0.0
    %235 = vmatprep.subr.mxu0 0.0
    %236 = vmatpush1.msra.mxu0 0.0
    %237 = vmatprep.subr.mxu0 0.0
    %238 = vmatpush1.msra.mxu0 0.0
    %239 = vmatprep.subr.mxu0 0.0
    %240 = vmatpush1.msra.mxu0 0.0
    %241 = vmatprep.subr.mxu0 0.0
    %242 = vmatpush1.msra.mxu0 0.0
    %243 = vmatprep.subr.mxu0 0.0
    %244 = vmatpush1.msra.mxu0 0.0
    %245 = vmatprep.subr.mxu0 0.0
    %246 = vmatpush1.msra.mxu0 0.0
    %247 = vmatprep.subr.mxu0 0.0
    %248 = vmatpush1.msra.mxu0 0.0
    %249 = vmatprep.subr.mxu0 0.0
    %250 = vmatpush1.msra.mxu0 0.0
    %251 = vmatprep.subr.mxu0 0.0
    %252 = vmatpush1.msra.mxu0 0.0
    %253 = vmatprep.subr.mxu0 0.0
    %254 = vmatpush1.msra.mxu0 0.0
    %255 = vmatprep.subr.mxu0 0.0
    %256 = vmatpush1.msra.mxu0 0.0
    %257 = vmatprep.subr.mxu0 0.0
    %258 = vmatpush1.msra.mxu0 %v179
    %259 = vmatprep.subr.mxu0 0.0
    %260 = vmatpush1.msra.mxu0 %v178
    %261 = vmatprep.subr.mxu0 0.0
    %262 = vmatpush2.msra.mxu0 0.0
    %263 = vmatprep.subr.mxu0 0.0
    %264 = vmatpush2.msra.mxu0 0.0
    %265 = vmatprep.subr.mxu0 0.0
    %266 = vmatpush2.msra.mxu0 0.0
    %267 = vmatprep.subr.mxu0 0.0
    %268 = vmatpush2.msra.mxu0 0.0
    %269 = vmatprep.subr.mxu0 0.0
    %270 = vmatpush2.msra.mxu0 0.0
    %271 = vmatprep.subr.mxu0 0.0
    %272 = vmatpush2.msra.mxu0 0.0
    %273 = vmatprep.subr.mxu0 0.0
    %274 = vmatpush2.msra.mxu0 0.0
    %275 = vmatprep.subr.mxu0 0.0
    %276 = vmatpush2.msra.mxu0 0.0
    %277 = vmatprep.subr.mxu0 0.0
    %278 = vmatpush2.msra.mxu0 0.0
    %279 = vmatprep.subr.mxu0 0.0
    %280 = vmatpush2.msra.mxu0 0.0
    %281 = vmatprep.subr.mxu0 0.0
    %282 = vmatpush2.msra.mxu0 0.0
    %283 = vmatprep.subr.mxu0 0.0
    %284 = vmatpush2.msra.mxu0 0.0
    %285 = vmatprep.subr.mxu0 0.0
    %286 = vmatpush2.msra.mxu0 0.0
    %287 = vmatprep.subr.mxu0 0.0
    %288 = vmatpush2.msra.mxu0 0.0
    %289 = vmatprep.subr.mxu0 0.0
    %290 = vmatpush2.msra.mxu0 0.0
    %291 = vmatprep.subr.mxu0 0.0
    %292 = vmatpush2.msra.mxu0 0.0
    %293 = vmatprep.mubr.f32.mxu0 0.0
    %294 = vmatmul.mubr.f32.gmra.mxu0 %v182
    %v295 = vpop.f32.mrf.mxu0
    %v296 = vadd.f32 0.0, %v295
    %v297 = vpop.f32.mrf.mxu0
    %298 = vmatprep.mubr.f32.mxu0 0.0
    %299 = vmatmul.mubr.f32.gmra.mxu0 %v185
    %v300 = vpop.f32.mrf.mxu0
    %v301 = vadd.f32 0.0, %v300
    %v302 = vpop.f32.mrf.mxu0
    %303 = vmatprep.mubr.f32.mxu0 0.0
    %304 = vmatmul.mubr.f32.gmra.mxu0 %v188
    %v305 = vpop.f32.mrf.mxu0
    %v306 = vadd.f32 0.0, %v305
    %v307 = vpop.f32.mrf.mxu0
    %308 = vmatprep.mubr.f32.mxu0 0.0
    %309 = vmatmul.mubr.f32.gmra.mxu0 %v191
    %v310 = vpop.f32.mrf.mxu0
    %v311 = vadd.f32 0.0, %v310
    %v312 = vpop.f32.mrf.mxu0
    %313 = vmatprep.mubr.f32.mxu0 0.0
    %314 = vmatmul.mubr.f32.gmra.mxu0 %v194
    %v315 = vpop.f32.mrf.mxu0
    %v316 = vadd.f32 0.0, %v315
    %v317 = vpop.f32.mrf.mxu0
    %318 = vmatprep.mubr.f32.mxu0 0.0
    %319 = vmatmul.mubr.f32.gmra.mxu0 %v197
    %v320 = vpop.f32.mrf.mxu0
    %v321 = vadd.f32 0.0, %v320
    %v322 = vpop.f32.mrf.mxu0
    %323 = vmatprep.mubr.f32.mxu0 0.0
    %324 = vmatmul.mubr.f32.gmra.mxu0 %v200
    %v325 = vpop.f32.mrf.mxu0
    %v326 = vadd.f32 0.0, %v325
    %v327 = vpop.f32.mrf.mxu0
    %328 = vmatprep.mubr.f32.mxu0 0.0
    %329 = vmatmul.mubr.f32.gmra.mxu0 %v203
    %v330 = vpop.f32.mrf.mxu0
    %v331 = vadd.f32 0.0, %v330
    %v332 = vpop.f32.mrf.mxu0
    %333 = vmatprep.mubr.f32.mxu0 0.0
    %334 = vmatmul.mubr.f32.gmra.mxu0 %v206
    %v335 = vpop.f32.mrf.mxu0
    %v336 = vadd.f32 0.0, %v335
    %v337 = vpop.f32.mrf.mxu0
    %338 = vmatprep.mubr.f32.mxu0 0.0
    %339 = vmatmul.mubr.f32.gmra.mxu0 %v209
    %v340 = vpop.f32.mrf.mxu0
    %v341 = vadd.f32 0.0, %v340
    %v342 = vpop.f32.mrf.mxu0
    %343 = vmatprep.mubr.f32.mxu0 0.0
    %344 = vmatmul.mubr.f32.gmra.mxu0 %v212
    %v345 = vpop.f32.mrf.mxu0
    %v346 = vadd.f32 0.0, %v345
    %v347 = vpop.f32.mrf.mxu0
    %348 = vmatprep.mubr.f32.mxu0 0.0
    %349 = vmatmul.mubr.f32.gmra.mxu0 %v215
    %v350 = vpop.f32.mrf.mxu0
    %v351 = vadd.f32 0.0, %v350
    %v352 = vpop.f32.mrf.mxu0
    %353 = vmatprep.mubr.f32.mxu0 0.0
    %354 = vmatmul.mubr.f32.gmra.mxu0 %v218
    %v355 = vpop.f32.mrf.mxu0
    %v356 = vadd.f32 0.0, %v355
    %v357 = vpop.f32.mrf.mxu0
    %358 = vmatprep.mubr.f32.mxu0 0.0
    %359 = vmatmul.mubr.f32.gmra.mxu0 %v221
    %v360 = vpop.f32.mrf.mxu0
    %v361 = vadd.f32 0.0, %v360
    %v362 = vpop.f32.mrf.mxu0
    %363 = vmatprep.mubr.f32.mxu0 0.0
    %364 = vmatmul.mubr.f32.gmra.mxu0 %v224
    %v365 = vpop.f32.mrf.mxu0
    %v366 = vadd.f32 0.0, %v365
    %v367 = vpop.f32.mrf.mxu0
    %368 = vmatprep.mubr.f32.mxu0 0.0
    %369 = vmatmul.mubr.f32.gmra.mxu0 %v227
    %v370 = vpop.f32.mrf.mxu0
    %v371 = vadd.f32 0.0, %v370
    %v372 = vpop.f32.mrf.mxu0
    %373 = vdwg.mxu0
    %v374 = vld [vmem:[%s3] sm:$0xff]
    %v375 = vld [vmem:[%s3 + $0x8] sm:$0xff]
    %v376 = vld [vmem:[%s3 + $0x10] sm:$0xff]
    %v377 = vld [vmem:[%s3 + $0x18] sm:$0xff]
    %vm378 = vcmp.gt.f32.partialorder %v374, 0.0
    %vm379 = vcmp.gt.f32.partialorder %v375, 0.0
    %vm380 = vcmp.gt.f32.partialorder %v376, 0.0
    %vm381 = vcmp.gt.f32.partialorder %v377, 0.0
    %v382 = vsel %vm378, 0.0, -1e+30
    %v383 = vsel %vm379, 0.0, -1e+30
    %v384 = vsel %vm380, 0.0, -1e+30
    %v385 = vsel %vm381, 0.0, -1e+30
    %vm386 = vcmask 64512
    %v388 = vsel %vm386, %v158, 0
    %v391 = vsel %vm386, %v159, 0
    %v394 = vsel %vm386, %v296, 0
    %v397 = vsel %vm386, %v301, 0
    %v400 = vsel %vm386, %v306, 0
    %v403 = vsel %vm386, %v311, 0
    %v406 = vsel %vm386, %v316, 0
    %v409 = vsel %vm386, %v321, 0
    %v412 = vsel %vm386, %v326, 0
    %v415 = vsel %vm386, %v331, 0
    %417 = vmatprep.subr.mxu0 0.0
    %418 = vmatpush1.xpose.msra.mxu0 0.0
    %419 = vmatprep.subr.mxu0 0.0
    %420 = vmatpush1.xpose.msra.mxu0 0.0
    %421 = vmatprep.subr.mxu0 0.0
    %422 = vmatpush1.xpose.msra.mxu0 0.0
    %423 = vmatprep.subr.mxu0 0.0
    %424 = vmatpush1.xpose.msra.mxu0 0.0
    %425 = vmatprep.subr.mxu0 0.0
    %426 = vmatpush1.xpose.msra.mxu0 0.0
    %427 = vmatprep.subr.mxu0 0.0
    %428 = vmatpush1.xpose.msra.mxu0 0.0
    %429 = vmatprep.subr.mxu0 0.0
    %430 = vmatpush1.xpose.msra.mxu0 0.0
    %431 = vmatprep.subr.mxu0 0.0
    %432 = vmatpush1.xpose.msra.mxu0 0.0
    %433 = vmatprep.subr.mxu0 0.0
    %434 = vmatpush1.xpose.msra.mxu0 %v415
    %435 = vmatprep.subr.mxu0 0.0
    %436 = vmatpush1.xpose.msra.mxu0 %v412
    %437 = vmatprep.subr.mxu0 0.0
    %438 = vmatpush1.xpose.msra.mxu0 %v409
    %439 = vmatprep.subr.mxu0 0.0
    %440 = vmatpush1.xpose.msra.mxu0 %v406
    %441 = vmatprep.subr.mxu0 0.0
    %442 = vmatpush1.xpose.msra.mxu0 %v403
    %443 = vmatprep.subr.mxu0 0.0
    %444 = vmatpush1.xpose.msra.mxu0 %v400
    %445 = vmatprep.subr.mxu0 0.0
    %446 = vmatpush1.xpose.msra.mxu0 %v397
    %447 = vmatprep.subr.mxu0 0.0
    %448 = vmatpush1.xpose.msra.mxu0 %v394
    %449 = vmatprep.subr.mxu0 0.0
    %450 = vmatpush2.xpose.msra.mxu0 0.0
    %451 = vmatprep.subr.mxu0 0.0
    %452 = vmatpush2.xpose.msra.mxu0 0.0
    %453 = vmatprep.subr.mxu0 0.0
    %454 = vmatpush2.xpose.msra.mxu0 0.0
    %455 = vmatprep.subr.mxu0 0.0
    %456 = vmatpush2.xpose.msra.mxu0 0.0
    %457 = vmatprep.subr.mxu0 0.0
    %458 = vmatpush2.xpose.msra.mxu0 0.0
    %459 = vmatprep.subr.mxu0 0.0
    %460 = vmatpush2.xpose.msra.mxu0 0.0
    %461 = vmatprep.subr.mxu0 0.0
    %462 = vmatpush2.xpose.msra.mxu0 0.0
    %463 = vmatprep.subr.mxu0 0.0
    %464 = vmatpush2.xpose.msra.mxu0 0.0
    %465 = vmatprep.subr.mxu0 0.0
    %466 = vmatpush2.xpose.msra.mxu0 0.0
    %467 = vmatprep.subr.mxu0 0.0
    %468 = vmatpush2.xpose.msra.mxu0 0.0
    %469 = vmatprep.subr.mxu0 0.0
    %470 = vmatpush2.xpose.msra.mxu0 0.0
    %471 = vmatprep.subr.mxu0 0.0
    %472 = vmatpush2.xpose.msra.mxu0 0.0
    %473 = vmatprep.subr.mxu0 0.0
    %474 = vmatpush2.xpose.msra.mxu0 0.0
    %475 = vmatprep.subr.mxu0 0.0
    %476 = vmatpush2.xpose.msra.mxu0 0.0
    %477 = vmatprep.subr.mxu0 0.0
    %478 = vmatpush2.xpose.msra.mxu0 0.0
    %479 = vmatprep.subr.mxu0 0.0
    %480 = vmatpush2.xpose.msra.mxu0 0.0
    %481 = vmatprep.mubr.f32.mxu0 0.0
    %482 = vmatmul.mubr.f32.gmra.mxu0 %v388
    %v483 = vpop.f32.mrf.mxu0
    %v484 = vadd.f32 %v382, %v483
    %v485 = vpop.f32.mrf.mxu0
    %486 = vmatprep.mubr.f32.mxu0 0.0
    %487 = vmatmul.mubr.f32.gmra.mxu0 %v391
    %v488 = vpop.f32.mrf.mxu0
    %v489 = vadd.f32 %v383, %v488
    %v490 = vpop.f32.mrf.mxu0
    %491 = vdwg.mxu0
    %vm492 = vcmask 523264
    %v493 = vsel %vm492, %v484, -inf
    %494 = vmax.xlane.f32.xlu0 %v493
    %v495 = vpop.xlane.xlu0 %494
    %v496 = vsel %vm492, %v489, -inf
    %497 = vmax.xlane.f32.xlu0 %v496
    %v498 = vpop.xlane.xlu0 %497
    %v499 = vsub.f32 %v484, %v495
    %v500 = vsub.f32 %v489, %v498
    %v501 = vmul.f32 %v499, 1.442695
    %v502 = vpow.pop %v501
    %v503 = vmul.f32 %v500, 1.442695
    %v504 = vpow.pop %v503
    %v505 = vsel %vm492, %v502, 0.0
    %506 = vadd.xlane.f32.xlu0 %v505
    %v507 = vpop.xlane.xlu0 %506
    %v508 = vsel %vm492, %v504, 0.0
    %509 = vadd.xlane.f32.xlu0 %v508
    %v510 = vpop.xlane.xlu0 %509
    %v511 = vrcp.pop %v507
    %v512 = vrcp.pop %v510
    %v513 = vmul.f32 %v502, %v511
    %v514 = vmul.f32 %v504, %v512
    %515 = vrot.lane.b32.xlu0 %v296, 96
    %v516 = vpop.permute.xlu0 %515
    %517 = vrot.lane.b32.xlu0 %v301, 96
    %v518 = vpop.permute.xlu0 %517
    %519 = vrot.lane.b32.xlu0 %v306, 96
    %v520 = vpop.permute.xlu0 %519
    %521 = vrot.lane.b32.xlu0 %v311, 96
    %v522 = vpop.permute.xlu0 %521
    %523 = vrot.lane.b32.xlu0 %v316, 96
    %v524 = vpop.permute.xlu0 %523
    %525 = vrot.lane.b32.xlu0 %v321, 96
    %v526 = vpop.permute.xlu0 %525
    %527 = vrot.lane.b32.xlu0 %v326, 96
    %v528 = vpop.permute.xlu0 %527
    %529 = vrot.lane.b32.xlu0 %v331, 96
    %v530 = vpop.permute.xlu0 %529
    %v540 = vsel %vm492, %v513, 0
    %v543 = vsel %vm492, %v514, 0
    %545 = vmatprep.subr.mxu0 0.0
    %546 = vmatpush1.msra.mxu0 0.0
    %547 = vmatprep.subr.mxu0 0.0
    %548 = vmatpush1.msra.mxu0 0.0
    %549 = vmatprep.subr.mxu0 0.0
    %550 = vmatpush1.msra.mxu0 0.0
    %551 = vmatprep.subr.mxu0 0.0
    %552 = vmatpush1.msra.mxu0 0.0
    %553 = vmatprep.subr.mxu0 0.0
    %554 = vmatpush1.msra.mxu0 0.0
    %555 = vmatprep.subr.mxu0 0.0
    %556 = vmatpush1.msra.mxu0 0.0
    %557 = vmatprep.subr.mxu0 0.0
    %558 = vmatpush1.msra.mxu0 0.0
    %559 = vmatprep.subr.mxu0 0.0
    %560 = vmatpush1.msra.mxu0 0.0
    %561 = vmatprep.subr.mxu0 0.0
    %562 = vmatpush1.msra.mxu0 %v530
    %563 = vmatprep.subr.mxu0 0.0
    %564 = vmatpush1.msra.mxu0 %v528
    %565 = vmatprep.subr.mxu0 0.0
    %566 = vmatpush1.msra.mxu0 %v526
    %567 = vmatprep.subr.mxu0 0.0
    %568 = vmatpush1.msra.mxu0 %v524
    %569 = vmatprep.subr.mxu0 0.0
    %570 = vmatpush1.msra.mxu0 %v522
    %571 = vmatprep.subr.mxu0 0.0
    %572 = vmatpush1.msra.mxu0 %v520
    %573 = vmatprep.subr.mxu0 0.0
    %574 = vmatpush1.msra.mxu0 %v518
    %575 = vmatprep.subr.mxu0 0.0
    %576 = vmatpush1.msra.mxu0 %v516
    %577 = vmatprep.subr.mxu0 0.0
    %578 = vmatpush2.msra.mxu0 0.0
    %579 = vmatprep.subr.mxu0 0.0
    %580 = vmatpush2.msra.mxu0 0.0
    %581 = vmatprep.subr.mxu0 0.0
    %582 = vmatpush2.msra.mxu0 0.0
    %583 = vmatprep.subr.mxu0 0.0
    %584 = vmatpush2.msra.mxu0 0.0
    %585 = vmatprep.subr.mxu0 0.0
    %586 = vmatpush2.msra.mxu0 0.0
    %587 = vmatprep.subr.mxu0 0.0
    %588 = vmatpush2.msra.mxu0 0.0
    %589 = vmatprep.subr.mxu0 0.0
    %590 = vmatpush2.msra.mxu0 0.0
    %591 = vmatprep.subr.mxu0 0.0
    %592 = vmatpush2.msra.mxu0 0.0
    %593 = vmatprep.subr.mxu0 0.0
    %594 = vmatpush2.msra.mxu0 0.0
    %595 = vmatprep.subr.mxu0 0.0
    %596 = vmatpush2.msra.mxu0 0.0
    %597 = vmatprep.subr.mxu0 0.0
    %598 = vmatpush2.msra.mxu0 0.0
    %599 = vmatprep.subr.mxu0 0.0
    %600 = vmatpush2.msra.mxu0 0.0
    %601 = vmatprep.subr.mxu0 0.0
    %602 = vmatpush2.msra.mxu0 0.0
    %603 = vmatprep.subr.mxu0 0.0
    %604 = vmatpush2.msra.mxu0 0.0
    %605 = vmatprep.subr.mxu0 0.0
    %606 = vmatpush2.msra.mxu0 0.0
    %607 = vmatprep.subr.mxu0 0.0
    %608 = vmatpush2.msra.mxu0 0.0
    %609 = vmatprep.mubr.f32.mxu0 0.0
    %610 = vmatmul.mubr.f32.gmra.mxu0 %v540
    %v611 = vpop.f32.mrf.mxu0
    %v612 = vadd.f32 0.0, %v611
    %v613 = vpop.f32.mrf.mxu0
    %614 = vmatprep.mubr.f32.mxu0 0.0
    %615 = vmatmul.mubr.f32.gmra.mxu0 %v543
    %v616 = vpop.f32.mrf.mxu0
    %v617 = vadd.f32 0.0, %v616
    %v618 = vpop.f32.mrf.mxu0
    %619 = vdwg.mxu0
    %620 = vst.msk [vmem:[#allocation2] sm:$0xff] %vm386, %v612
    %621 = vst.msk [vmem:[#allocation2 + $0x8] sm:$0xff] %vm386, %v617
    %622 = vrot.lane.b32.xlu0 %v158, 120
    %v623 = vpop.permute.xlu0 %622
    %624 = vrot.lane.b32.xlu0 %v159, 120
    %v625 = vpop.permute.xlu0 %624
    %626 = vrot.lane.b32.xlu0 %v296, 120
    %v627 = vpop.permute.xlu0 %626
    %628 = vrot.lane.b32.xlu0 %v301, 120
    %v629 = vpop.permute.xlu0 %628
    %630 = vrot.lane.b32.xlu0 %v306, 120
    %v631 = vpop.permute.xlu0 %630
    %632 = vrot.lane.b32.xlu0 %v311, 120
    %v633 = vpop.permute.xlu0 %632
    %634 = vrot.lane.b32.xlu0 %v316, 120
    %v635 = vpop.permute.xlu0 %634
    %636 = vrot.lane.b32.xlu0 %v321, 120
    %v637 = vpop.permute.xlu0 %636
    %638 = vrot.lane.b32.xlu0 %v326, 120
    %v639 = vpop.permute.xlu0 %638
    %640 = vrot.lane.b32.xlu0 %v331, 120
    %v641 = vpop.permute.xlu0 %640
    %v642 = vsel %vm386, %v623, 0
    %v644 = vsel %vm386, %v625, 0
    %v646 = vsel %vm386, %v627, 0
    %v648 = vsel %vm386, %v629, 0
    %v650 = vsel %vm386, %v631, 0
    %v652 = vsel %vm386, %v633, 0
    %v654 = vsel %vm386, %v635, 0
    %v656 = vsel %vm386, %v637, 0
    %v658 = vsel %vm386, %v639, 0
    %v660 = vsel %vm386, %v641, 0
    %662 = vmatprep.subr.mxu0 0.0
    %663 = vmatpush1.xpose.msra.mxu0 0.0
    %664 = vmatprep.subr.mxu0 0.0
    %665 = vmatpush1.xpose.msra.mxu0 0.0
    %666 = vmatprep.subr.mxu0 0.0
    %667 = vmatpush1.xpose.msra.mxu0 0.0
    %668 = vmatprep.subr.mxu0 0.0
    %669 = vmatpush1.xpose.msra.mxu0 0.0
    %670 = vmatprep.subr.mxu0 0.0
    %671 = vmatpush1.xpose.msra.mxu0 0.0
    %672 = vmatprep.subr.mxu0 0.0
    %673 = vmatpush1.xpose.msra.mxu0 0.0
    %674 = vmatprep.subr.mxu0 0.0
    %675 = vmatpush1.xpose.msra.mxu0 0.0
    %676 = vmatprep.subr.mxu0 0.0
    %677 = vmatpush1.xpose.msra.mxu0 0.0
    %678 = vmatprep.subr.mxu0 0.0
    %679 = vmatpush1.xpose.msra.mxu0 %v660
    %680 = vmatprep.subr.mxu0 0.0
    %681 = vmatpush1.xpose.msra.mxu0 %v658
    %682 = vmatprep.subr.mxu0 0.0
    %683 = vmatpush1.xpose.msra.mxu0 %v656
    %684 = vmatprep.subr.mxu0 0.0
    %685 = vmatpush1.xpose.msra.mxu0 %v654
    %686 = vmatprep.subr.mxu0 0.0
    %687 = vmatpush1.xpose.msra.mxu0 %v652
    %688 = vmatprep.subr.mxu0 0.0
    %689 = vmatpush1.xpose.msra.mxu0 %v650
    %690 = vmatprep.subr.mxu0 0.0
    %691 = vmatpush1.xpose.msra.mxu0 %v648
    %692 = vmatprep.subr.mxu0 0.0
    %693 = vmatpush1.xpose.msra.mxu0 %v646
    %694 = vmatprep.subr.mxu0 0.0
    %695 = vmatpush2.xpose.msra.mxu0 0.0
    %696 = vmatprep.subr.mxu0 0.0
    %697 = vmatpush2.xpose.msra.mxu0 0.0
    %698 = vmatprep.subr.mxu0 0.0
    %699 = vmatpush2.xpose.msra.mxu0 0.0
    %700 = vmatprep.subr.mxu0 0.0
    %701 = vmatpush2.xpose.msra.mxu0 0.0
    %702 = vmatprep.subr.mxu0 0.0
    %703 = vmatpush2.xpose.msra.mxu0 0.0
    %704 = vmatprep.subr.mxu0 0.0
    %705 = vmatpush2.xpose.msra.mxu0 0.0
    %706 = vmatprep.subr.mxu0 0.0
    %707 = vmatpush2.xpose.msra.mxu0 0.0
    %708 = vmatprep.subr.mxu0 0.0
    %709 = vmatpush2.xpose.msra.mxu0 0.0
    %710 = vmatprep.subr.mxu0 0.0
    %711 = vmatpush2.xpose.msra.mxu0 0.0
    %712 = vmatprep.subr.mxu0 0.0
    %713 = vmatpush2.xpose.msra.mxu0 0.0
    %714 = vmatprep.subr.mxu0 0.0
    %715 = vmatpush2.xpose.msra.mxu0 0.0
    %716 = vmatprep.subr.mxu0 0.0
    %717 = vmatpush2.xpose.msra.mxu0 0.0
    %718 = vmatprep.subr.mxu0 0.0
    %719 = vmatpush2.xpose.msra.mxu0 0.0
    %720 = vmatprep.subr.mxu0 0.0
    %721 = vmatpush2.xpose.msra.mxu0 0.0
    %722 = vmatprep.subr.mxu0 0.0
    %723 = vmatpush2.xpose.msra.mxu0 0.0
    %724 = vmatprep.subr.mxu0 0.0
    %725 = vmatpush2.xpose.msra.mxu0 0.0
    %726 = vmatprep.mubr.f32.mxu0 0.0
    %727 = vmatmul.mubr.f32.gmra.mxu0 %v642
    %v728 = vpop.f32.mrf.mxu0
    %v729 = vadd.f32 %v382, %v728
    %v730 = vpop.f32.mrf.mxu0
    %731 = vmatprep.mubr.f32.mxu0 0.0
    %732 = vmatmul.mubr.f32.gmra.mxu0 %v644
    %v733 = vpop.f32.mrf.mxu0
    %v734 = vadd.f32 %v383, %v733
    %v735 = vpop.f32.mrf.mxu0
    %736 = vdwg.mxu0
    %v737 = vsel %vm492, %v729, -inf
    %738 = vmax.xlane.f32.xlu0 %v737
    %v739 = vpop.xlane.xlu0 %738
    %v740 = vsel %vm492, %v734, -inf
    %741 = vmax.xlane.f32.xlu0 %v740
    %v742 = vpop.xlane.xlu0 %741
    %v743 = vsub.f32 %v729, %v739
    %v744 = vsub.f32 %v734, %v742
    %v745 = vmul.f32 %v743, 1.442695
    %v746 = vpow.pop %v745
    %v747 = vmul.f32 %v744, 1.442695
    %v748 = vpow.pop %v747
    %v749 = vsel %vm492, %v746, 0.0
    %750 = vadd.xlane.f32.xlu0 %v749
    %v751 = vpop.xlane.xlu0 %750
    %v752 = vsel %vm492, %v748, 0.0
    %753 = vadd.xlane.f32.xlu0 %v752
    %v754 = vpop.xlane.xlu0 %753
    %v755 = vrcp.pop %v751
    %v756 = vrcp.pop %v754
    %v757 = vmul.f32 %v746, %v755
    %v758 = vmul.f32 %v748, %v756
    %759 = vrot.lane.b32.xlu0 %v296, 88
    %v760 = vpop.permute.xlu0 %759
    %761 = vrot.lane.b32.xlu0 %v301, 88
    %v762 = vpop.permute.xlu0 %761
    %763 = vrot.lane.b32.xlu0 %v306, 88
    %v764 = vpop.permute.xlu0 %763
    %765 = vrot.lane.b32.xlu0 %v311, 88
    %v766 = vpop.permute.xlu0 %765
    %767 = vrot.lane.b32.xlu0 %v316, 88
    %v768 = vpop.permute.xlu0 %767
    %769 = vrot.lane.b32.xlu0 %v321, 88
    %v770 = vpop.permute.xlu0 %769
    %771 = vrot.lane.b32.xlu0 %v326, 88
    %v772 = vpop.permute.xlu0 %771
    %773 = vrot.lane.b32.xlu0 %v331, 88
    %v774 = vpop.permute.xlu0 %773
    %v784 = vsel %vm492, %v757, 0
    %v787 = vsel %vm492, %v758, 0
    %789 = vmatprep.subr.mxu0 0.0
    %790 = vmatpush1.msra.mxu0 0.0
    %791 = vmatprep.subr.mxu0 0.0
    %792 = vmatpush1.msra.mxu0 0.0
    %793 = vmatprep.subr.mxu0 0.0
    %794 = vmatpush1.msra.mxu0 0.0
    %795 = vmatprep.subr.mxu0 0.0
    %796 = vmatpush1.msra.mxu0 0.0
    %797 = vmatprep.subr.mxu0 0.0
    %798 = vmatpush1.msra.mxu0 0.0
    %799 = vmatprep.subr.mxu0 0.0
    %800 = vmatpush1.msra.mxu0 0.0
    %801 = vmatprep.subr.mxu0 0.0
    %802 = vmatpush1.msra.mxu0 0.0
    %803 = vmatprep.subr.mxu0 0.0
    %804 = vmatpush1.msra.mxu0 0.0
    %805 = vmatprep.subr.mxu0 0.0
    %806 = vmatpush1.msra.mxu0 %v774
    %807 = vmatprep.subr.mxu0 0.0
    %808 = vmatpush1.msra.mxu0 %v772
    %809 = vmatprep.subr.mxu0 0.0
    %810 = vmatpush1.msra.mxu0 %v770
    %811 = vmatprep.subr.mxu0 0.0
    %812 = vmatpush1.msra.mxu0 %v768
    %813 = vmatprep.subr.mxu0 0.0
    %814 = vmatpush1.msra.mxu0 %v766
    %815 = vmatprep.subr.mxu0 0.0
    %816 = vmatpush1.msra.mxu0 %v764
    %817 = vmatprep.subr.mxu0 0.0
    %818 = vmatpush1.msra.mxu0 %v762
    %819 = vmatprep.subr.mxu0 0.0
    %820 = vmatpush1.msra.mxu0 %v760
    %821 = vmatprep.subr.mxu0 0.0
    %822 = vmatpush2.msra.mxu0 0.0
    %823 = vmatprep.subr.mxu0 0.0
    %824 = vmatpush2.msra.mxu0 0.0
    %825 = vmatprep.subr.mxu0 0.0
    %826 = vmatpush2.msra.mxu0 0.0
    %827 = vmatprep.subr.mxu0 0.0
    %828 = vmatpush2.msra.mxu0 0.0
    %829 = vmatprep.subr.mxu0 0.0
    %830 = vmatpush2.msra.mxu0 0.0
    %831 = vmatprep.subr.mxu0 0.0
    %832 = vmatpush2.msra.mxu0 0.0
    %833 = vmatprep.subr.mxu0 0.0
    %834 = vmatpush2.msra.mxu0 0.0
    %835 = vmatprep.subr.mxu0 0.0
    %836 = vmatpush2.msra.mxu0 0.0
    %837 = vmatprep.subr.mxu0 0.0
    %838 = vmatpush2.msra.mxu0 0.0
    %839 = vmatprep.subr.mxu0 0.0
    %840 = vmatpush2.msra.mxu0 0.0
    %841 = vmatprep.subr.mxu0 0.0
    %842 = vmatpush2.msra.mxu0 0.0
    %843 = vmatprep.subr.mxu0 0.0
    %844 = vmatpush2.msra.mxu0 0.0
    %845 = vmatprep.subr.mxu0 0.0
    %846 = vmatpush2.msra.mxu0 0.0
    %847 = vmatprep.subr.mxu0 0.0
    %848 = vmatpush2.msra.mxu0 0.0
    %849 = vmatprep.subr.mxu0 0.0
    %850 = vmatpush2.msra.mxu0 0.0
    %851 = vmatprep.subr.mxu0 0.0
    %852 = vmatpush2.msra.mxu0 0.0
    %853 = vmatprep.mubr.f32.mxu0 0.0
    %854 = vmatmul.mubr.f32.gmra.mxu0 %v784
    %v855 = vpop.f32.mrf.mxu0
    %v856 = vadd.f32 0.0, %v855
    %v857 = vpop.f32.mrf.mxu0
    %858 = vmatprep.mubr.f32.mxu0 0.0
    %859 = vmatmul.mubr.f32.gmra.mxu0 %v787
    %v860 = vpop.f32.mrf.mxu0
    %v861 = vadd.f32 0.0, %v860
    %v862 = vpop.f32.mrf.mxu0
    %863 = vdwg.mxu0
    %866 = vrot.lane.b32.xlu0 %v856, 8
    %v867 = vpop.permute.xlu0 %866
    %868 = vrot.lane.b32.xlu0 %v861, 8
    %v869 = vpop.permute.xlu0 %868
    %vm872 = vcmask 130112
    %873 = vst.msk [vmem:[#allocation2] sm:$0xff] %vm872, %v867
    %874 = vst.msk [vmem:[#allocation2 + $0x8] sm:$0xff] %vm872, %v869
    %875 = vrot.lane.b32.xlu0 %v158, 112
    %v876 = vpop.permute.xlu0 %875
    %877 = vrot.lane.b32.xlu0 %v159, 112
    %v878 = vpop.permute.xlu0 %877
    %879 = vrot.lane.b32.xlu0 %v296, 112
    %v880 = vpop.permute.xlu0 %879
    %881 = vrot.lane.b32.xlu0 %v301, 112
    %v882 = vpop.permute.xlu0 %881
    %883 = vrot.lane.b32.xlu0 %v306, 112
    %v884 = vpop.permute.xlu0 %883
    %885 = vrot.lane.b32.xlu0 %v311, 112
    %v886 = vpop.permute.xlu0 %885
    %887 = vrot.lane.b32.xlu0 %v316, 112
    %v888 = vpop.permute.xlu0 %887
    %889 = vrot.lane.b32.xlu0 %v321, 112
    %v890 = vpop.permute.xlu0 %889
    %891 = vrot.lane.b32.xlu0 %v326, 112
    %v892 = vpop.permute.xlu0 %891
    %893 = vrot.lane.b32.xlu0 %v331, 112
    %v894 = vpop.permute.xlu0 %893
    %v895 = vsel %vm386, %v876, 0
    %v897 = vsel %vm386, %v878, 0
    %v899 = vsel %vm386, %v880, 0
    %v901 = vsel %vm386, %v882, 0
    %v903 = vsel %vm386, %v884, 0
    %v905 = vsel %vm386, %v886, 0
    %v907 = vsel %vm386, %v888, 0
    %v909 = vsel %vm386, %v890, 0
    %v911 = vsel %vm386, %v892, 0
    %v913 = vsel %vm386, %v894, 0
    %915 = vmatprep.subr.mxu0 0.0
    %916 = vmatpush1.xpose.msra.mxu0 0.0
    %917 = vmatprep.subr.mxu0 0.0
    %918 = vmatpush1.xpose.msra.mxu0 0.0
    %919 = vmatprep.subr.mxu0 0.0
    %920 = vmatpush1.xpose.msra.mxu0 0.0
    %921 = vmatprep.subr.mxu0 0.0
    %922 = vmatpush1.xpose.msra.mxu0 0.0
    %923 = vmatprep.subr.mxu0 0.0
    %924 = vmatpush1.xpose.msra.mxu0 0.0
    %925 = vmatprep.subr.mxu0 0.0
    %926 = vmatpush1.xpose.msra.mxu0 0.0
    %927 = vmatprep.subr.mxu0 0.0
    %928 = vmatpush1.xpose.msra.mxu0 0.0
    %929 = vmatprep.subr.mxu0 0.0
    %930 = vmatpush1.xpose.msra.mxu0 0.0
    %931 = vmatprep.subr.mxu0 0.0
    %932 = vmatpush1.xpose.msra.mxu0 %v913
    %933 = vmatprep.subr.mxu0 0.0
    %934 = vmatpush1.xpose.msra.mxu0 %v911
    %935 = vmatprep.subr.mxu0 0.0
    %936 = vmatpush1.xpose.msra.mxu0 %v909
    %937 = vmatprep.subr.mxu0 0.0
    %938 = vmatpush1.xpose.msra.mxu0 %v907
    %939 = vmatprep.subr.mxu0 0.0
    %940 = vmatpush1.xpose.msra.mxu0 %v905
    %941 = vmatprep.subr.mxu0 0.0
    %942 = vmatpush1.xpose.msra.mxu0 %v903
    %943 = vmatprep.subr.mxu0 0.0
    %944 = vmatpush1.xpose.msra.mxu0 %v901
    %945 = vmatprep.subr.mxu0 0.0
    %946 = vmatpush1.xpose.msra.mxu0 %v899
    %947 = vmatprep.subr.mxu0 0.0
    %948 = vmatpush2.xpose.msra.mxu0 0.0
    %949 = vmatprep.subr.mxu0 0.0
    %950 = vmatpush2.xpose.msra.mxu0 0.0
    %951 = vmatprep.subr.mxu0 0.0
    %952 = vmatpush2.xpose.msra.mxu0 0.0
    %953 = vmatprep.subr.mxu0 0.0
    %954 = vmatpush2.xpose.msra.mxu0 0.0
    %955 = vmatprep.subr.mxu0 0.0
    %956 = vmatpush2.xpose.msra.mxu0 0.0
    %957 = vmatprep.subr.mxu0 0.0
    %958 = vmatpush2.xpose.msra.mxu0 0.0
    %959 = vmatprep.subr.mxu0 0.0
    %960 = vmatpush2.xpose.msra.mxu0 0.0
    %961 = vmatprep.subr.mxu0 0.0
    %962 = vmatpush2.xpose.msra.mxu0 0.0
    %963 = vmatprep.subr.mxu0 0.0
    %964 = vmatpush2.xpose.msra.mxu0 0.0
    %965 = vmatprep.subr.mxu0 0.0
    %966 = vmatpush2.xpose.msra.mxu0 0.0
    %967 = vmatprep.subr.mxu0 0.0
    %968 = vmatpush2.xpose.msra.mxu0 0.0
    %969 = vmatprep.subr.mxu0 0.0
    %970 = vmatpush2.xpose.msra.mxu0 0.0
    %971 = vmatprep.subr.mxu0 0.0
    %972 = vmatpush2.xpose.msra.mxu0 0.0
    %973 = vmatprep.subr.mxu0 0.0
    %974 = vmatpush2.xpose.msra.mxu0 0.0
    %975 = vmatprep.subr.mxu0 0.0
    %976 = vmatpush2.xpose.msra.mxu0 0.0
    %977 = vmatprep.subr.mxu0 0.0
    %978 = vmatpush2.xpose.msra.mxu0 0.0
    %979 = vmatprep.mubr.f32.mxu0 0.0
    %980 = vmatmul.mubr.f32.gmra.mxu0 %v895
    %v981 = vpop.f32.mrf.mxu0
    %v982 = vadd.f32 %v382, %v981
    %v983 = vpop.f32.mrf.mxu0
    %984 = vmatprep.mubr.f32.mxu0 0.0
    %985 = vmatmul.mubr.f32.gmra.mxu0 %v897
    %v986 = vpop.f32.mrf.mxu0
    %v987 = vadd.f32 %v383, %v986
    %v988 = vpop.f32.mrf.mxu0
    %989 = vdwg.mxu0
    %v990 = vsel %vm492, %v982, -inf
    %991 = vmax.xlane.f32.xlu0 %v990
    %v992 = vpop.xlane.xlu0 %991
    %v993 = vsel %vm492, %v987, -inf
    %994 = vmax.xlane.f32.xlu0 %v993
    %v995 = vpop.xlane.xlu0 %994
    %v996 = vsub.f32 %v982, %v992
    %v997 = vsub.f32 %v987, %v995
    %v998 = vmul.f32 %v996, 1.442695
    %v999 = vpow.pop %v998
    %v1000 = vmul.f32 %v997, 1.442695
    %v1001 = vpow.pop %v1000
    %v1002 = vsel %vm492, %v999, 0.0
    %1003 = vadd.xlane.f32.xlu0 %v1002
    %v1004 = vpop.xlane.xlu0 %1003
    %v1005 = vsel %vm492, %v1001, 0.0
    %1006 = vadd.xlane.f32.xlu0 %v1005
    %v1007 = vpop.xlane.xlu0 %1006
    %v1008 = vrcp.pop %v1004
    %v1009 = vrcp.pop %v1007
    %v1010 = vmul.f32 %v999, %v1008
    %v1011 = vmul.f32 %v1001, %v1009
    %1012 = vrot.lane.b32.xlu0 %v296, 80
    %v1013 = vpop.permute.xlu0 %1012
    %1014 = vrot.lane.b32.xlu0 %v301, 80
    %v1015 = vpop.permute.xlu0 %1014
    %1016 = vrot.lane.b32.xlu0 %v306, 80
    %v1017 = vpop.permute.xlu0 %1016
    %1018 = vrot.lane.b32.xlu0 %v311, 80
    %v1019 = vpop.permute.xlu0 %1018
    %1020 = vrot.lane.b32.xlu0 %v316, 80
    %v1021 = vpop.permute.xlu0 %1020
    %1022 = vrot.lane.b32.xlu0 %v321, 80
    %v1023 = vpop.permute.xlu0 %1022
    %1024 = vrot.lane.b32.xlu0 %v326, 80
    %v1025 = vpop.permute.xlu0 %1024
    %1026 = vrot.lane.b32.xlu0 %v331, 80
    %v1027 = vpop.permute.xlu0 %1026
    %v1037 = vsel %vm492, %v1010, 0
    %v1040 = vsel %vm492, %v1011, 0
    %1042 = vmatprep.subr.mxu0 0.0
    %1043 = vmatpush1.msra.mxu0 0.0
    %1044 = vmatprep.subr.mxu0 0.0
    %1045 = vmatpush1.msra.mxu0 0.0
    %1046 = vmatprep.subr.mxu0 0.0
    %1047 = vmatpush1.msra.mxu0 0.0
    %1048 = vmatprep.subr.mxu0 0.0
    %1049 = vmatpush1.msra.mxu0 0.0
    %1050 = vmatprep.subr.mxu0 0.0
    %1051 = vmatpush1.msra.mxu0 0.0
    %1052 = vmatprep.subr.mxu0 0.0
    %1053 = vmatpush1.msra.mxu0 0.0
    %1054 = vmatprep.subr.mxu0 0.0
    %1055 = vmatpush1.msra.mxu0 0.0
    %1056 = vmatprep.subr.mxu0 0.0
    %1057 = vmatpush1.msra.mxu0 0.0
    %1058 = vmatprep.subr.mxu0 0.0
    %1059 = vmatpush1.msra.mxu0 %v1027
    %1060 = vmatprep.subr.mxu0 0.0
    %1061 = vmatpush1.msra.mxu0 %v1025
    %1062 = vmatprep.subr.mxu0 0.0
    %1063 = vmatpush1.msra.mxu0 %v1023
    %1064 = vmatprep.subr.mxu0 0.0
    %1065 = vmatpush1.msra.mxu0 %v1021
    %1066 = vmatprep.subr.mxu0 0.0
    %1067 = vmatpush1.msra.mxu0 %v1019
    %1068 = vmatprep.subr.mxu0 0.0
    %1069 = vmatpush1.msra.mxu0 %v1017
    %1070 = vmatprep.subr.mxu0 0.0
    %1071 = vmatpush1.msra.mxu0 %v1015
    %1072 = vmatprep.subr.mxu0 0.0
    %1073 = vmatpush1.msra.mxu0 %v1013
    %1074 = vmatprep.subr.mxu0 0.0
    %1075 = vmatpush2.msra.mxu0 0.0
    %1076 = vmatprep.subr.mxu0 0.0
    %1077 = vmatpush2.msra.mxu0 0.0
    %1078 = vmatprep.subr.mxu0 0.0
    %1079 = vmatpush2.msra.mxu0 0.0
    %1080 = vmatprep.subr.mxu0 0.0
    %1081 = vmatpush2.msra.mxu0 0.0
    %1082 = vmatprep.subr.mxu0 0.0
    %1083 = vmatpush2.msra.mxu0 0.0
    %1084 = vmatprep.subr.mxu0 0.0
    %1085 = vmatpush2.msra.mxu0 0.0
    %1086 = vmatprep.subr.mxu0 0.0
    %1087 = vmatpush2.msra.mxu0 0.0
    %1088 = vmatprep.subr.mxu0 0.0
    %1089 = vmatpush2.msra.mxu0 0.0
    %1090 = vmatprep.subr.mxu0 0.0
    %1091 = vmatpush2.msra.mxu0 0.0
    %1092 = vmatprep.subr.mxu0 0.0
    %1093 = vmatpush2.msra.mxu0 0.0
    %1094 = vmatprep.subr.mxu0 0.0
    %1095 = vmatpush2.msra.mxu0 0.0
    %1096 = vmatprep.subr.mxu0 0.0
    %1097 = vmatpush2.msra.mxu0 0.0
    %1098 = vmatprep.subr.mxu0 0.0
    %1099 = vmatpush2.msra.mxu0 0.0
    %1100 = vmatprep.subr.mxu0 0.0
    %1101 = vmatpush2.msra.mxu0 0.0
    %1102 = vmatprep.subr.mxu0 0.0
    %1103 = vmatpush2.msra.mxu0 0.0
    %1104 = vmatprep.subr.mxu0 0.0
    %1105 = vmatpush2.msra.mxu0 0.0
    %1106 = vmatprep.mubr.f32.mxu0 0.0
    %1107 = vmatmul.mubr.f32.gmra.mxu0 %v1037
    %v1108 = vpop.f32.mrf.mxu0
    %v1109 = vadd.f32 0.0, %v1108
    %v1110 = vpop.f32.mrf.mxu0
    %1111 = vmatprep.mubr.f32.mxu0 0.0
    %1112 = vmatmul.mubr.f32.gmra.mxu0 %v1040
    %v1113 = vpop.f32.mrf.mxu0
    %v1114 = vadd.f32 0.0, %v1113
    %v1115 = vpop.f32.mrf.mxu0
    %1116 = vdwg.mxu0
    %1119 = vrot.lane.b32.xlu0 %v1109, 16
    %v1120 = vpop.permute.xlu0 %1119
    %1121 = vrot.lane.b32.xlu0 %v1114, 16
    %v1122 = vpop.permute.xlu0 %1121
    %vm1125 = vcmask 195712
    %1126 = vst.msk [vmem:[#allocation2] sm:$0xff] %vm1125, %v1120
    %1127 = vst.msk [vmem:[#allocation2 + $0x8] sm:$0xff] %vm1125, %v1122
    %1128 = vrot.lane.b32.xlu0 %v158, 104
    %v1129 = vpop.permute.xlu0 %1128
    %1130 = vrot.lane.b32.xlu0 %v159, 104
    %v1131 = vpop.permute.xlu0 %1130
    %1132 = vrot.lane.b32.xlu0 %v296, 104
    %v1133 = vpop.permute.xlu0 %1132
    %1134 = vrot.lane.b32.xlu0 %v301, 104
    %v1135 = vpop.permute.xlu0 %1134
    %1136 = vrot.lane.b32.xlu0 %v306, 104
    %v1137 = vpop.permute.xlu0 %1136
    %1138 = vrot.lane.b32.xlu0 %v311, 104
    %v1139 = vpop.permute.xlu0 %1138
    %1140 = vrot.lane.b32.xlu0 %v316, 104
    %v1141 = vpop.permute.xlu0 %1140
    %1142 = vrot.lane.b32.xlu0 %v321, 104
    %v1143 = vpop.permute.xlu0 %1142
    %1144 = vrot.lane.b32.xlu0 %v326, 104
    %v1145 = vpop.permute.xlu0 %1144
    %1146 = vrot.lane.b32.xlu0 %v331, 104
    %v1147 = vpop.permute.xlu0 %1146
    %v1148 = vsel %vm386, %v1129, 0
    %v1150 = vsel %vm386, %v1131, 0
    %v1152 = vsel %vm386, %v1133, 0
    %v1154 = vsel %vm386, %v1135, 0
    %v1156 = vsel %vm386, %v1137, 0
    %v1158 = vsel %vm386, %v1139, 0
    %v1160 = vsel %vm386, %v1141, 0
    %v1162 = vsel %vm386, %v1143, 0
    %v1164 = vsel %vm386, %v1145, 0
    %v1166 = vsel %vm386, %v1147, 0
    %1168 = vmatprep.subr.mxu0 0.0
    %1169 = vmatpush1.xpose.msra.mxu0 0.0
    %1170 = vmatprep.subr.mxu0 0.0
    %1171 = vmatpush1.xpose.msra.mxu0 0.0
    %1172 = vmatprep.subr.mxu0 0.0
    %1173 = vmatpush1.xpose.msra.mxu0 0.0
    %1174 = vmatprep.subr.mxu0 0.0
    %1175 = vmatpush1.xpose.msra.mxu0 0.0
    %1176 = vmatprep.subr.mxu0 0.0
    %1177 = vmatpush1.xpose.msra.mxu0 0.0
    %1178 = vmatprep.subr.mxu0 0.0
    %1179 = vmatpush1.xpose.msra.mxu0 0.0
    %1180 = vmatprep.subr.mxu0 0.0
    %1181 = vmatpush1.xpose.msra.mxu0 0.0
    %1182 = vmatprep.subr.mxu0 0.0
    %1183 = vmatpush1.xpose.msra.mxu0 0.0
    %1184 = vmatprep.subr.mxu0 0.0
    %1185 = vmatpush1.xpose.msra.mxu0 %v1166
    %1186 = vmatprep.subr.mxu0 0.0
    %1187 = vmatpush1.xpose.msra.mxu0 %v1164
    %1188 = vmatprep.subr.mxu0 0.0
    %1189 = vmatpush1.xpose.msra.mxu0 %v1162
    %1190 = vmatprep.subr.mxu0 0.0
    %1191 = vmatpush1.xpose.msra.mxu0 %v1160
    %1192 = vmatprep.subr.mxu0 0.0
    %1193 = vmatpush1.xpose.msra.mxu0 %v1158
    %1194 = vmatprep.subr.mxu0 0.0
    %1195 = vmatpush1.xpose.msra.mxu0 %v1156
    %1196 = vmatprep.subr.mxu0 0.0
    %1197 = vmatpush1.xpose.msra.mxu0 %v1154
    %1198 = vmatprep.subr.mxu0 0.0
    %1199 = vmatpush1.xpose.msra.mxu0 %v1152
    %1200 = vmatprep.subr.mxu0 0.0
    %1201 = vmatpush2.xpose.msra.mxu0 0.0
    %1202 = vmatprep.subr.mxu0 0.0
    %1203 = vmatpush2.xpose.msra.mxu0 0.0
    %1204 = vmatprep.subr.mxu0 0.0
    %1205 = vmatpush2.xpose.msra.mxu0 0.0
    %1206 = vmatprep.subr.mxu0 0.0
    %1207 = vmatpush2.xpose.msra.mxu0 0.0
    %1208 = vmatprep.subr.mxu0 0.0
    %1209 = vmatpush2.xpose.msra.mxu0 0.0
    %1210 = vmatprep.subr.mxu0 0.0
    %1211 = vmatpush2.xpose.msra.mxu0 0.0
    %1212 = vmatprep.subr.mxu0 0.0
    %1213 = vmatpush2.xpose.msra.mxu0 0.0
    %1214 = vmatprep.subr.mxu0 0.0
    %1215 = vmatpush2.xpose.msra.mxu0 0.0
    %1216 = vmatprep.subr.mxu0 0.0
    %1217 = vmatpush2.xpose.msra.mxu0 0.0
    %1218 = vmatprep.subr.mxu0 0.0
    %1219 = vmatpush2.xpose.msra.mxu0 0.0
    %1220 = vmatprep.subr.mxu0 0.0
    %1221 = vmatpush2.xpose.msra.mxu0 0.0
    %1222 = vmatprep.subr.mxu0 0.0
    %1223 = vmatpush2.xpose.msra.mxu0 0.0
    %1224 = vmatprep.subr.mxu0 0.0
    %1225 = vmatpush2.xpose.msra.mxu0 0.0
    %1226 = vmatprep.subr.mxu0 0.0
    %1227 = vmatpush2.xpose.msra.mxu0 0.0
    %1228 = vmatprep.subr.mxu0 0.0
    %1229 = vmatpush2.xpose.msra.mxu0 0.0
    %1230 = vmatprep.subr.mxu0 0.0
    %1231 = vmatpush2.xpose.msra.mxu0 0.0
    %1232 = vmatprep.mubr.f32.mxu0 0.0
    %1233 = vmatmul.mubr.f32.gmra.mxu0 %v1148
    %v1234 = vpop.f32.mrf.mxu0
    %v1235 = vadd.f32 %v382, %v1234
    %v1236 = vpop.f32.mrf.mxu0
    %1237 = vmatprep.mubr.f32.mxu0 0.0
    %1238 = vmatmul.mubr.f32.gmra.mxu0 %v1150
    %v1239 = vpop.f32.mrf.mxu0
    %v1240 = vadd.f32 %v383, %v1239
    %v1241 = vpop.f32.mrf.mxu0
    %1242 = vdwg.mxu0
    %v1243 = vsel %vm492, %v1235, -inf
    %1244 = vmax.xlane.f32.xlu0 %v1243
    %v1245 = vpop.xlane.xlu0 %1244
    %v1246 = vsel %vm492, %v1240, -inf
    %1247 = vmax.xlane.f32.xlu0 %v1246
    %v1248 = vpop.xlane.xlu0 %1247
    %v1249 = vsub.f32 %v1235, %v1245
    %v1250 = vsub.f32 %v1240, %v1248
    %v1251 = vmul.f32 %v1249, 1.442695
    %v1252 = vpow.pop %v1251
    %v1253 = vmul.f32 %v1250, 1.442695
    %v1254 = vpow.pop %v1253
    %v1255 = vsel %vm492, %v1252, 0.0
    %1256 = vadd.xlane.f32.xlu0 %v1255
    %v1257 = vpop.xlane.xlu0 %1256
    %v1258 = vsel %vm492, %v1254, 0.0
    %1259 = vadd.xlane.f32.xlu0 %v1258
    %v1260 = vpop.xlane.xlu0 %1259
    %v1261 = vrcp.pop %v1257
    %v1262 = vrcp.pop %v1260
    %v1263 = vmul.f32 %v1252, %v1261
    %v1264 = vmul.f32 %v1254, %v1262
    %1265 = vrot.lane.b32.xlu0 %v296, 72
    %v1266 = vpop.permute.xlu0 %1265
    %1267 = vrot.lane.b32.xlu0 %v301, 72
    %v1268 = vpop.permute.xlu0 %1267
    %1269 = vrot.lane.b32.xlu0 %v306, 72
    %v1270 = vpop.permute.xlu0 %1269
    %1271 = vrot.lane.b32.xlu0 %v311, 72
    %v1272 = vpop.permute.xlu0 %1271
    %1273 = vrot.lane.b32.xlu0 %v316, 72
    %v1274 = vpop.permute.xlu0 %1273
    %1275 = vrot.lane.b32.xlu0 %v321, 72
    %v1276 = vpop.permute.xlu0 %1275
    %1277 = vrot.lane.b32.xlu0 %v326, 72
    %v1278 = vpop.permute.xlu0 %1277
    %1279 = vrot.lane.b32.xlu0 %v331, 72
    %v1280 = vpop.permute.xlu0 %1279
    %v1290 = vsel %vm492, %v1263, 0
    %v1293 = vsel %vm492, %v1264, 0
    %1295 = vmatprep.subr.mxu0 0.0
    %1296 = vmatpush1.msra.mxu0 0.0
    %1297 = vmatprep.subr.mxu0 0.0
    %1298 = vmatpush1.msra.mxu0 0.0
    %1299 = vmatprep.subr.mxu0 0.0
    %1300 = vmatpush1.msra.mxu0 0.0
    %1301 = vmatprep.subr.mxu0 0.0
    %1302 = vmatpush1.msra.mxu0 0.0
    %1303 = vmatprep.subr.mxu0 0.0
    %1304 = vmatpush1.msra.mxu0 0.0
    %1305 = vmatprep.subr.mxu0 0.0
    %1306 = vmatpush1.msra.mxu0 0.0
    %1307 = vmatprep.subr.mxu0 0.0
    %1308 = vmatpush1.msra.mxu0 0.0
    %1309 = vmatprep.subr.mxu0 0.0
    %1310 = vmatpush1.msra.mxu0 0.0
    %1311 = vmatprep.subr.mxu0 0.0
    %1312 = vmatpush1.msra.mxu0 %v1280
    %1313 = vmatprep.subr.mxu0 0.0
    %1314 = vmatpush1.msra.mxu0 %v1278
    %1315 = vmatprep.subr.mxu0 0.0
    %1316 = vmatpush1.msra.mxu0 %v1276
    %1317 = vmatprep.subr.mxu0 0.0
    %1318 = vmatpush1.msra.mxu0 %v1274
    %1319 = vmatprep.subr.mxu0 0.0
    %1320 = vmatpush1.msra.mxu0 %v1272
    %1321 = vmatprep.subr.mxu0 0.0
    %1322 = vmatpush1.msra.mxu0 %v1270
    %1323 = vmatprep.subr.mxu0 0.0
    %1324 = vmatpush1.msra.mxu0 %v1268
    %1325 = vmatprep.subr.mxu0 0.0
    %1326 = vmatpush1.msra.mxu0 %v1266
    %1327 = vmatprep.subr.mxu0 0.0
    %1328 = vmatpush2.msra.mxu0 0.0
    %1329 = vmatprep.subr.mxu0 0.0
    %1330 = vmatpush2.msra.mxu0 0.0
    %1331 = vmatprep.subr.mxu0 0.0
    %1332 = vmatpush2.msra.mxu0 0.0
    %1333 = vmatprep.subr.mxu0 0.0
    %1334 = vmatpush2.msra.mxu0 0.0
    %1335 = vmatprep.subr.mxu0 0.0
    %1336 = vmatpush2.msra.mxu0 0.0
    %1337 = vmatprep.subr.mxu0 0.0
    %1338 = vmatpush2.msra.mxu0 0.0
    %1339 = vmatprep.subr.mxu0 0.0
    %1340 = vmatpush2.msra.mxu0 0.0
    %1341 = vmatprep.subr.mxu0 0.0
    %1342 = vmatpush2.msra.mxu0 0.0
    %1343 = vmatprep.subr.mxu0 0.0
    %1344 = vmatpush2.msra.mxu0 0.0
    %1345 = vmatprep.subr.mxu0 0.0
    %1346 = vmatpush2.msra.mxu0 0.0
    %1347 = vmatprep.subr.mxu0 0.0
    %1348 = vmatpush2.msra.mxu0 0.0
    %1349 = vmatprep.subr.mxu0 0.0
    %1350 = vmatpush2.msra.mxu0 0.0
    %1351 = vmatprep.subr.mxu0 0.0
    %1352 = vmatpush2.msra.mxu0 0.0
    %1353 = vmatprep.subr.mxu0 0.0
    %1354 = vmatpush2.msra.mxu0 0.0
    %1355 = vmatprep.subr.mxu0 0.0
    %1356 = vmatpush2.msra.mxu0 0.0
    %1357 = vmatprep.subr.mxu0 0.0
    %1358 = vmatpush2.msra.mxu0 0.0
    %1359 = vmatprep.mubr.f32.mxu0 0.0
    %1360 = vmatmul.mubr.f32.gmra.mxu0 %v1290
    %v1361 = vpop.f32.mrf.mxu0
    %v1362 = vadd.f32 0.0, %v1361
    %v1363 = vpop.f32.mrf.mxu0
    %1364 = vmatprep.mubr.f32.mxu0 0.0
    %1365 = vmatmul.mubr.f32.gmra.mxu0 %v1293
    %v1366 = vpop.f32.mrf.mxu0
    %v1367 = vadd.f32 0.0, %v1366
    %v1368 = vpop.f32.mrf.mxu0
    %1369 = vdwg.mxu0
    %1372 = vrot.lane.b32.xlu0 %v1362, 24
    %v1373 = vpop.permute.xlu0 %1372
    %1374 = vrot.lane.b32.xlu0 %v1367, 24
    %v1375 = vpop.permute.xlu0 %1374
    %vm1378 = vcmask 261312
    %1379 = vst.msk [vmem:[#allocation2] sm:$0xff] %vm1378, %v1373
    %1380 = vst.msk [vmem:[#allocation2 + $0x8] sm:$0xff] %vm1378, %v1375
    %v1382 = vsel %vm386, %v160, 0
    %v1385 = vsel %vm386, %v161, 0
    %v1388 = vsel %vm386, %v336, 0
    %v1391 = vsel %vm386, %v341, 0
    %v1394 = vsel %vm386, %v346, 0
    %v1397 = vsel %vm386, %v351, 0
    %v1400 = vsel %vm386, %v356, 0
    %v1403 = vsel %vm386, %v361, 0
    %v1406 = vsel %vm386, %v366, 0
    %v1409 = vsel %vm386, %v371, 0
    %1411 = vmatprep.subr.mxu0 0.0
    %1412 = vmatpush1.xpose.msra.mxu0 0.0
    %1413 = vmatprep.subr.mxu0 0.0
    %1414 = vmatpush1.xpose.msra.mxu0 0.0
    %1415 = vmatprep.subr.mxu0 0.0
    %1416 = vmatpush1.xpose.msra.mxu0 0.0
    %1417 = vmatprep.subr.mxu0 0.0
    %1418 = vmatpush1.xpose.msra.mxu0 0.0
    %1419 = vmatprep.subr.mxu0 0.0
    %1420 = vmatpush1.xpose.msra.mxu0 0.0
    %1421 = vmatprep.subr.mxu0 0.0
    %1422 = vmatpush1.xpose.msra.mxu0 0.0
    %1423 = vmatprep.subr.mxu0 0.0
    %1424 = vmatpush1.xpose.msra.mxu0 0.0
    %1425 = vmatprep.subr.mxu0 0.0
    %1426 = vmatpush1.xpose.msra.mxu0 0.0
    %1427 = vmatprep.subr.mxu0 0.0
    %1428 = vmatpush1.xpose.msra.mxu0 %v1409
    %1429 = vmatprep.subr.mxu0 0.0
    %1430 = vmatpush1.xpose.msra.mxu0 %v1406
    %1431 = vmatprep.subr.mxu0 0.0
    %1432 = vmatpush1.xpose.msra.mxu0 %v1403
    %1433 = vmatprep.subr.mxu0 0.0
    %1434 = vmatpush1.xpose.msra.mxu0 %v1400
    %1435 = vmatprep.subr.mxu0 0.0
    %1436 = vmatpush1.xpose.msra.mxu0 %v1397
    %1437 = vmatprep.subr.mxu0 0.0
    %1438 = vmatpush1.xpose.msra.mxu0 %v1394
    %1439 = vmatprep.subr.mxu0 0.0
    %1440 = vmatpush1.xpose.msra.mxu0 %v1391
    %1441 = vmatprep.subr.mxu0 0.0
    %1442 = vmatpush1.xpose.msra.mxu0 %v1388
    %1443 = vmatprep.subr.mxu0 0.0
    %1444 = vmatpush2.xpose.msra.mxu0 0.0
    %1445 = vmatprep.subr.mxu0 0.0
    %1446 = vmatpush2.xpose.msra.mxu0 0.0
    %1447 = vmatprep.subr.mxu0 0.0
    %1448 = vmatpush2.xpose.msra.mxu0 0.0
    %1449 = vmatprep.subr.mxu0 0.0
    %1450 = vmatpush2.xpose.msra.mxu0 0.0
    %1451 = vmatprep.subr.mxu0 0.0
    %1452 = vmatpush2.xpose.msra.mxu0 0.0
    %1453 = vmatprep.subr.mxu0 0.0
    %1454 = vmatpush2.xpose.msra.mxu0 0.0
    %1455 = vmatprep.subr.mxu0 0.0
    %1456 = vmatpush2.xpose.msra.mxu0 0.0
    %1457 = vmatprep.subr.mxu0 0.0
    %1458 = vmatpush2.xpose.msra.mxu0 0.0
    %1459 = vmatprep.subr.mxu0 0.0
    %1460 = vmatpush2.xpose.msra.mxu0 0.0
    %1461 = vmatprep.subr.mxu0 0.0
    %1462 = vmatpush2.xpose.msra.mxu0 0.0
    %1463 = vmatprep.subr.mxu0 0.0
    %1464 = vmatpush2.xpose.msra.mxu0 0.0
    %1465 = vmatprep.subr.mxu0 0.0
    %1466 = vmatpush2.xpose.msra.mxu0 0.0
    %1467 = vmatprep.subr.mxu0 0.0
    %1468 = vmatpush2.xpose.msra.mxu0 0.0
    %1469 = vmatprep.subr.mxu0 0.0
    %1470 = vmatpush2.xpose.msra.mxu0 0.0
    %1471 = vmatprep.subr.mxu0 0.0
    %1472 = vmatpush2.xpose.msra.mxu0 0.0
    %1473 = vmatprep.subr.mxu0 0.0
    %1474 = vmatpush2.xpose.msra.mxu0 0.0
    %1475 = vmatprep.mubr.f32.mxu0 0.0
    %1476 = vmatmul.mubr.f32.gmra.mxu0 %v1382
    %v1477 = vpop.f32.mrf.mxu0
    %v1478 = vadd.f32 %v384, %v1477
    %v1479 = vpop.f32.mrf.mxu0
    %1480 = vmatprep.mubr.f32.mxu0 0.0
    %1481 = vmatmul.mubr.f32.gmra.mxu0 %v1385
    %v1482 = vpop.f32.mrf.mxu0
    %v1483 = vadd.f32 %v385, %v1482
    %v1484 = vpop.f32.mrf.mxu0
    %1485 = vdwg.mxu0
    %v1486 = vsel %vm492, %v1478, -inf
    %1487 = vmax.xlane.f32.xlu0 %v1486
    %v1488 = vpop.xlane.xlu0 %1487
    %v1489 = vsel %vm492, %v1483, -inf
    %1490 = vmax.xlane.f32.xlu0 %v1489
    %v1491 = vpop.xlane.xlu0 %1490
    %v1492 = vsub.f32 %v1478, %v1488
    %v1493 = vsub.f32 %v1483, %v1491
    %v1494 = vmul.f32 %v1492, 1.442695
    %v1495 = vpow.pop %v1494
    %v1496 = vmul.f32 %v1493, 1.442695
    %v1497 = vpow.pop %v1496
    %v1498 = vsel %vm492, %v1495, 0.0
    %1499 = vadd.xlane.f32.xlu0 %v1498
    %v1500 = vpop.xlane.xlu0 %1499
    %v1501 = vsel %vm492, %v1497, 0.0
    %1502 = vadd.xlane.f32.xlu0 %v1501
    %v1503 = vpop.xlane.xlu0 %1502
    %v1504 = vrcp.pop %v1500
    %v1505 = vrcp.pop %v1503
    %v1506 = vmul.f32 %v1495, %v1504
    %v1507 = vmul.f32 %v1497, %v1505
    %1508 = vrot.lane.b32.xlu0 %v336, 96
    %v1509 = vpop.permute.xlu0 %1508
    %1510 = vrot.lane.b32.xlu0 %v341, 96
    %v1511 = vpop.permute.xlu0 %1510
    %1512 = vrot.lane.b32.xlu0 %v346, 96
    %v1513 = vpop.permute.xlu0 %1512
    %1514 = vrot.lane.b32.xlu0 %v351, 96
    %v1515 = vpop.permute.xlu0 %1514
    %1516 = vrot.lane.b32.xlu0 %v356, 96
    %v1517 = vpop.permute.xlu0 %1516
    %1518 = vrot.lane.b32.xlu0 %v361, 96
    %v1519 = vpop.permute.xlu0 %1518
    %1520 = vrot.lane.b32.xlu0 %v366, 96
    %v1521 = vpop.permute.xlu0 %1520
    %1522 = vrot.lane.b32.xlu0 %v371, 96
    %v1523 = vpop.permute.xlu0 %1522
    %v1533 = vsel %vm492, %v1506, 0
    %v1536 = vsel %vm492, %v1507, 0
    %1538 = vmatprep.subr.mxu0 0.0
    %1539 = vmatpush1.msra.mxu0 0.0
    %1540 = vmatprep.subr.mxu0 0.0
    %1541 = vmatpush1.msra.mxu0 0.0
    %1542 = vmatprep.subr.mxu0 0.0
    %1543 = vmatpush1.msra.mxu0 0.0
    %1544 = vmatprep.subr.mxu0 0.0
    %1545 = vmatpush1.msra.mxu0 0.0
    %1546 = vmatprep.subr.mxu0 0.0
    %1547 = vmatpush1.msra.mxu0 0.0
    %1548 = vmatprep.subr.mxu0 0.0
    %1549 = vmatpush1.msra.mxu0 0.0
    %1550 = vmatprep.subr.mxu0 0.0
    %1551 = vmatpush1.msra.mxu0 0.0
    %1552 = vmatprep.subr.mxu0 0.0
    %1553 = vmatpush1.msra.mxu0 0.0
    %1554 = vmatprep.subr.mxu0 0.0
    %1555 = vmatpush1.msra.mxu0 %v1523
    %1556 = vmatprep.subr.mxu0 0.0
    %1557 = vmatpush1.msra.mxu0 %v1521
    %1558 = vmatprep.subr.mxu0 0.0
    %1559 = vmatpush1.msra.mxu0 %v1519
    %1560 = vmatprep.subr.mxu0 0.0
    %1561 = vmatpush1.msra.mxu0 %v1517
    %1562 = vmatprep.subr.mxu0 0.0
    %1563 = vmatpush1.msra.mxu0 %v1515
    %1564 = vmatprep.subr.mxu0 0.0
    %1565 = vmatpush1.msra.mxu0 %v1513
    %1566 = vmatprep.subr.mxu0 0.0
    %1567 = vmatpush1.msra.mxu0 %v1511
    %1568 = vmatprep.subr.mxu0 0.0
    %1569 = vmatpush1.msra.mxu0 %v1509
    %1570 = vmatprep.subr.mxu0 0.0
    %1571 = vmatpush2.msra.mxu0 0.0
    %1572 = vmatprep.subr.mxu0 0.0
    %1573 = vmatpush2.msra.mxu0 0.0
    %1574 = vmatprep.subr.mxu0 0.0
    %1575 = vmatpush2.msra.mxu0 0.0
    %1576 = vmatprep.subr.mxu0 0.0
    %1577 = vmatpush2.msra.mxu0 0.0
    %1578 = vmatprep.subr.mxu0 0.0
    %1579 = vmatpush2.msra.mxu0 0.0
    %1580 = vmatprep.subr.mxu0 0.0
    %1581 = vmatpush2.msra.mxu0 0.0
    %1582 = vmatprep.subr.mxu0 0.0
    %1583 = vmatpush2.msra.mxu0 0.0
    %1584 = vmatprep.subr.mxu0 0.0
    %1585 = vmatpush2.msra.mxu0 0.0
    %1586 = vmatprep.subr.mxu0 0.0
    %1587 = vmatpush2.msra.mxu0 0.0
    %1588 = vmatprep.subr.mxu0 0.0
    %1589 = vmatpush2.msra.mxu0 0.0
    %1590 = vmatprep.subr.mxu0 0.0
    %1591 = vmatpush2.msra.mxu0 0.0
    %1592 = vmatprep.subr.mxu0 0.0
    %1593 = vmatpush2.msra.mxu0 0.0
    %1594 = vmatprep.subr.mxu0 0.0
    %1595 = vmatpush2.msra.mxu0 0.0
    %1596 = vmatprep.subr.mxu0 0.0
    %1597 = vmatpush2.msra.mxu0 0.0
    %1598 = vmatprep.subr.mxu0 0.0
    %1599 = vmatpush2.msra.mxu0 0.0
    %1600 = vmatprep.subr.mxu0 0.0
    %1601 = vmatpush2.msra.mxu0 0.0
    %1602 = vmatprep.mubr.f32.mxu0 0.0
    %1603 = vmatmul.mubr.f32.gmra.mxu0 %v1533
    %v1604 = vpop.f32.mrf.mxu0
    %v1605 = vadd.f32 0.0, %v1604
    %v1606 = vpop.f32.mrf.mxu0
    %1607 = vmatprep.mubr.f32.mxu0 0.0
    %1608 = vmatmul.mubr.f32.gmra.mxu0 %v1536
    %v1609 = vpop.f32.mrf.mxu0
    %v1610 = vadd.f32 0.0, %v1609
    %v1611 = vpop.f32.mrf.mxu0
    %1612 = vdwg.mxu0
    %1613 = vst.msk [vmem:[#allocation2 + $0x10] sm:$0xff] %vm386, %v1605
    %1614 = vst.msk [vmem:[#allocation2 + $0x18] sm:$0xff] %vm386, %v1610
    %1615 = vrot.lane.b32.xlu0 %v160, 120
    %v1616 = vpop.permute.xlu0 %1615
    %1617 = vrot.lane.b32.xlu0 %v161, 120
    %v1618 = vpop.permute.xlu0 %1617
    %1619 = vrot.lane.b32.xlu0 %v336, 120
    %v1620 = vpop.permute.xlu0 %1619
    %1621 = vrot.lane.b32.xlu0 %v341, 120
    %v1622 = vpop.permute.xlu0 %1621
    %1623 = vrot.lane.b32.xlu0 %v346, 120
    %v1624 = vpop.permute.xlu0 %1623
    %1625 = vrot.lane.b32.xlu0 %v351, 120
    %v1626 = vpop.permute.xlu0 %1625
    %1627 = vrot.lane.b32.xlu0 %v356, 120
    %v1628 = vpop.permute.xlu0 %1627
    %1629 = vrot.lane.b32.xlu0 %v361, 120
    %v1630 = vpop.permute.xlu0 %1629
    %1631 = vrot.lane.b32.xlu0 %v366, 120
    %v1632 = vpop.permute.xlu0 %1631
    %1633 = vrot.lane.b32.xlu0 %v371, 120
    %v1634 = vpop.permute.xlu0 %1633
    %v1635 = vsel %vm386, %v1616, 0
    %v1637 = vsel %vm386, %v1618, 0
    %v1639 = vsel %vm386, %v1620, 0
    %v1641 = vsel %vm386, %v1622, 0
    %v1643 = vsel %vm386, %v1624, 0
    %v1645 = vsel %vm386, %v1626, 0
    %v1647 = vsel %vm386, %v1628, 0
    %v1649 = vsel %vm386, %v1630, 0
    %v1651 = vsel %vm386, %v1632, 0
    %v1653 = vsel %vm386, %v1634, 0
    %1655 = vmatprep.subr.mxu0 0.0
    %1656 = vmatpush1.xpose.msra.mxu0 0.0
    %1657 = vmatprep.subr.mxu0 0.0
    %1658 = vmatpush1.xpose.msra.mxu0 0.0
    %1659 = vmatprep.subr.mxu0 0.0
    %1660 = vmatpush1.xpose.msra.mxu0 0.0
    %1661 = vmatprep.subr.mxu0 0.0
    %1662 = vmatpush1.xpose.msra.mxu0 0.0
    %1663 = vmatprep.subr.mxu0 0.0
    %1664 = vmatpush1.xpose.msra.mxu0 0.0
    %1665 = vmatprep.subr.mxu0 0.0
    %1666 = vmatpush1.xpose.msra.mxu0 0.0
    %1667 = vmatprep.subr.mxu0 0.0
    %1668 = vmatpush1.xpose.msra.mxu0 0.0
    %1669 = vmatprep.subr.mxu0 0.0
    %1670 = vmatpush1.xpose.msra.mxu0 0.0
    %1671 = vmatprep.subr.mxu0 0.0
    %1672 = vmatpush1.xpose.msra.mxu0 %v1653
    %1673 = vmatprep.subr.mxu0 0.0
    %1674 = vmatpush1.xpose.msra.mxu0 %v1651
    %1675 = vmatprep.subr.mxu0 0.0
    %1676 = vmatpush1.xpose.msra.mxu0 %v1649
    %1677 = vmatprep.subr.mxu0 0.0
    %1678 = vmatpush1.xpose.msra.mxu0 %v1647
    %1679 = vmatprep.subr.mxu0 0.0
    %1680 = vmatpush1.xpose.msra.mxu0 %v1645
    %1681 = vmatprep.subr.mxu0 0.0
    %1682 = vmatpush1.xpose.msra.mxu0 %v1643
    %1683 = vmatprep.subr.mxu0 0.0
    %1684 = vmatpush1.xpose.msra.mxu0 %v1641
    %1685 = vmatprep.subr.mxu0 0.0
    %1686 = vmatpush1.xpose.msra.mxu0 %v1639
    %1687 = vmatprep.subr.mxu0 0.0
    %1688 = vmatpush2.xpose.msra.mxu0 0.0
    %1689 = vmatprep.subr.mxu0 0.0
    %1690 = vmatpush2.xpose.msra.mxu0 0.0
    %1691 = vmatprep.subr.mxu0 0.0
    %1692 = vmatpush2.xpose.msra.mxu0 0.0
    %1693 = vmatprep.subr.mxu0 0.0
    %1694 = vmatpush2.xpose.msra.mxu0 0.0
    %1695 = vmatprep.subr.mxu0 0.0
    %1696 = vmatpush2.xpose.msra.mxu0 0.0
    %1697 = vmatprep.subr.mxu0 0.0
    %1698 = vmatpush2.xpose.msra.mxu0 0.0
    %1699 = vmatprep.subr.mxu0 0.0
    %1700 = vmatpush2.xpose.msra.mxu0 0.0
    %1701 = vmatprep.subr.mxu0 0.0
    %1702 = vmatpush2.xpose.msra.mxu0 0.0
    %1703 = vmatprep.subr.mxu0 0.0
    %1704 = vmatpush2.xpose.msra.mxu0 0.0
    %1705 = vmatprep.subr.mxu0 0.0
    %1706 = vmatpush2.xpose.msra.mxu0 0.0
    %1707 = vmatprep.subr.mxu0 0.0
    %1708 = vmatpush2.xpose.msra.mxu0 0.0
    %1709 = vmatprep.subr.mxu0 0.0
    %1710 = vmatpush2.xpose.msra.mxu0 0.0
    %1711 = vmatprep.subr.mxu0 0.0
    %1712 = vmatpush2.xpose.msra.mxu0 0.0
    %1713 = vmatprep.subr.mxu0 0.0
    %1714 = vmatpush2.xpose.msra.mxu0 0.0
    %1715 = vmatprep.subr.mxu0 0.0
    %1716 = vmatpush2.xpose.msra.mxu0 0.0
    %1717 = vmatprep.subr.mxu0 0.0
    %1718 = vmatpush2.xpose.msra.mxu0 0.0
    %1719 = vmatprep.mubr.f32.mxu0 0.0
    %1720 = vmatmul.mubr.f32.gmra.mxu0 %v1635
    %v1721 = vpop.f32.mrf.mxu0
    %v1722 = vadd.f32 %v384, %v1721
    %v1723 = vpop.f32.mrf.mxu0
    %1724 = vmatprep.mubr.f32.mxu0 0.0
    %1725 = vmatmul.mubr.f32.gmra.mxu0 %v1637
    %v1726 = vpop.f32.mrf.mxu0
    %v1727 = vadd.f32 %v385, %v1726
    %v1728 = vpop.f32.mrf.mxu0
    %1729 = vdwg.mxu0
    %v1730 = vsel %vm492, %v1722, -inf
    %1731 = vmax.xlane.f32.xlu0 %v1730
    %v1732 = vpop.xlane.xlu0 %1731
    %v1733 = vsel %vm492, %v1727, -inf
    %1734 = vmax.xlane.f32.xlu0 %v1733
    %v1735 = vpop.xlane.xlu0 %1734
    %v1736 = vsub.f32 %v1722, %v1732
    %v1737 = vsub.f32 %v1727, %v1735
    %v1738 = vmul.f32 %v1736, 1.442695
    %v1739 = vpow.pop %v1738
    %v1740 = vmul.f32 %v1737, 1.442695
    %v1741 = vpow.pop %v1740
    %v1742 = vsel %vm492, %v1739, 0.0
    %1743 = vadd.xlane.f32.xlu0 %v1742
    %v1744 = vpop.xlane.xlu0 %1743
    %v1745 = vsel %vm492, %v1741, 0.0
    %1746 = vadd.xlane.f32.xlu0 %v1745
    %v1747 = vpop.xlane.xlu0 %1746
    %v1748 = vrcp.pop %v1744
    %v1749 = vrcp.pop %v1747
    %v1750 = vmul.f32 %v1739, %v1748
    %v1751 = vmul.f32 %v1741, %v1749
    %1752 = vrot.lane.b32.xlu0 %v336, 88
    %v1753 = vpop.permute.xlu0 %1752
    %1754 = vrot.lane.b32.xlu0 %v341, 88
    %v1755 = vpop.permute.xlu0 %1754
    %1756 = vrot.lane.b32.xlu0 %v346, 88
    %v1757 = vpop.permute.xlu0 %1756
    %1758 = vrot.lane.b32.xlu0 %v351, 88
    %v1759 = vpop.permute.xlu0 %1758
    %1760 = vrot.lane.b32.xlu0 %v356, 88
    %v1761 = vpop.permute.xlu0 %1760
    %1762 = vrot.lane.b32.xlu0 %v361, 88
    %v1763 = vpop.permute.xlu0 %1762
    %1764 = vrot.lane.b32.xlu0 %v366, 88
    %v1765 = vpop.permute.xlu0 %1764
    %1766 = vrot.lane.b32.xlu0 %v371, 88
    %v1767 = vpop.permute.xlu0 %1766
    %v1777 = vsel %vm492, %v1750, 0
    %v1780 = vsel %vm492, %v1751, 0
    %1782 = vmatprep.subr.mxu0 0.0
    %1783 = vmatpush1.msra.mxu0 0.0
    %1784 = vmatprep.subr.mxu0 0.0
    %1785 = vmatpush1.msra.mxu0 0.0
    %1786 = vmatprep.subr.mxu0 0.0
    %1787 = vmatpush1.msra.mxu0 0.0
    %1788 = vmatprep.subr.mxu0 0.0
    %1789 = vmatpush1.msra.mxu0 0.0
    %1790 = vmatprep.subr.mxu0 0.0
    %1791 = vmatpush1.msra.mxu0 0.0
    %1792 = vmatprep.subr.mxu0 0.0
    %1793 = vmatpush1.msra.mxu0 0.0
    %1794 = vmatprep.subr.mxu0 0.0
    %1795 = vmatpush1.msra.mxu0 0.0
    %1796 = vmatprep.subr.mxu0 0.0
    %1797 = vmatpush1.msra.mxu0 0.0
    %1798 = vmatprep.subr.mxu0 0.0
    %1799 = vmatpush1.msra.mxu0 %v1767
    %1800 = vmatprep.subr.mxu0 0.0
    %1801 = vmatpush1.msra.mxu0 %v1765
    %1802 = vmatprep.subr.mxu0 0.0
    %1803 = vmatpush1.msra.mxu0 %v1763
    %1804 = vmatprep.subr.mxu0 0.0
    %1805 = vmatpush1.msra.mxu0 %v1761
    %1806 = vmatprep.subr.mxu0 0.0
    %1807 = vmatpush1.msra.mxu0 %v1759
    %1808 = vmatprep.subr.mxu0 0.0
    %1809 = vmatpush1.msra.mxu0 %v1757
    %1810 = vmatprep.subr.mxu0 0.0
    %1811 = vmatpush1.msra.mxu0 %v1755
    %1812 = vmatprep.subr.mxu0 0.0
    %1813 = vmatpush1.msra.mxu0 %v1753
    %1814 = vmatprep.subr.mxu0 0.0
    %1815 = vmatpush2.msra.mxu0 0.0
    %1816 = vmatprep.subr.mxu0 0.0
    %1817 = vmatpush2.msra.mxu0 0.0
    %1818 = vmatprep.subr.mxu0 0.0
    %1819 = vmatpush2.msra.mxu0 0.0
    %1820 = vmatprep.subr.mxu0 0.0
    %1821 = vmatpush2.msra.mxu0 0.0
    %1822 = vmatprep.subr.mxu0 0.0
    %1823 = vmatpush2.msra.mxu0 0.0
    %1824 = vmatprep.subr.mxu0 0.0
    %1825 = vmatpush2.msra.mxu0 0.0
    %1826 = vmatprep.subr.mxu0 0.0
    %1827 = vmatpush2.msra.mxu0 0.0
    %1828 = vmatprep.subr.mxu0 0.0
    %1829 = vmatpush2.msra.mxu0 0.0
    %1830 = vmatprep.subr.mxu0 0.0
    %1831 = vmatpush2.msra.mxu0 0.0
    %1832 = vmatprep.subr.mxu0 0.0
    %1833 = vmatpush2.msra.mxu0 0.0
    %1834 = vmatprep.subr.mxu0 0.0
    %1835 = vmatpush2.msra.mxu0 0.0
    %1836 = vmatprep.subr.mxu0 0.0
    %1837 = vmatpush2.msra.mxu0 0.0
    %1838 = vmatprep.subr.mxu0 0.0
    %1839 = vmatpush2.msra.mxu0 0.0
    %1840 = vmatprep.subr.mxu0 0.0
    %1841 = vmatpush2.msra.mxu0 0.0
    %1842 = vmatprep.subr.mxu0 0.0
    %1843 = vmatpush2.msra.mxu0 0.0
    %1844 = vmatprep.subr.mxu0 0.0
    %1845 = vmatpush2.msra.mxu0 0.0
    %1846 = vmatprep.mubr.f32.mxu0 0.0
    %1847 = vmatmul.mubr.f32.gmra.mxu0 %v1777
    %v1848 = vpop.f32.mrf.mxu0
    %v1849 = vadd.f32 0.0, %v1848
    %v1850 = vpop.f32.mrf.mxu0
    %1851 = vmatprep.mubr.f32.mxu0 0.0
    %1852 = vmatmul.mubr.f32.gmra.mxu0 %v1780
    %v1853 = vpop.f32.mrf.mxu0
    %v1854 = vadd.f32 0.0, %v1853
    %v1855 = vpop.f32.mrf.mxu0
    %1856 = vdwg.mxu0
    %1859 = vrot.lane.b32.xlu0 %v1849, 8
    %v1860 = vpop.permute.xlu0 %1859
    %1861 = vrot.lane.b32.xlu0 %v1854, 8
    %v1862 = vpop.permute.xlu0 %1861
    %1865 = vst.msk [vmem:[#allocation2 + $0x10] sm:$0xff] %vm872, %v1860
    %1866 = vst.msk [vmem:[#allocation2 + $0x18] sm:$0xff] %vm872, %v1862
    %1867 = vrot.lane.b32.xlu0 %v160, 112
    %v1868 = vpop.permute.xlu0 %1867
    %1869 = vrot.lane.b32.xlu0 %v161, 112
    %v1870 = vpop.permute.xlu0 %1869
    %1871 = vrot.lane.b32.xlu0 %v336, 112
    %v1872 = vpop.permute.xlu0 %1871
    %1873 = vrot.lane.b32.xlu0 %v341, 112
    %v1874 = vpop.permute.xlu0 %1873
    %1875 = vrot.lane.b32.xlu0 %v346, 112
    %v1876 = vpop.permute.xlu0 %1875
    %1877 = vrot.lane.b32.xlu0 %v351, 112
    %v1878 = vpop.permute.xlu0 %1877
    %1879 = vrot.lane.b32.xlu0 %v356, 112
    %v1880 = vpop.permute.xlu0 %1879
    %1881 = vrot.lane.b32.xlu0 %v361, 112
    %v1882 = vpop.permute.xlu0 %1881
    %1883 = vrot.lane.b32.xlu0 %v366, 112
    %v1884 = vpop.permute.xlu0 %1883
    %1885 = vrot.lane.b32.xlu0 %v371, 112
    %v1886 = vpop.permute.xlu0 %1885
    %v1887 = vsel %vm386, %v1868, 0
    %v1889 = vsel %vm386, %v1870, 0
    %v1891 = vsel %vm386, %v1872, 0
    %v1893 = vsel %vm386, %v1874, 0
    %v1895 = vsel %vm386, %v1876, 0
    %v1897 = vsel %vm386, %v1878, 0
    %v1899 = vsel %vm386, %v1880, 0
    %v1901 = vsel %vm386, %v1882, 0
    %v1903 = vsel %vm386, %v1884, 0
    %v1905 = vsel %vm386, %v1886, 0
    %1907 = vmatprep.subr.mxu0 0.0
    %1908 = vmatpush1.xpose.msra.mxu0 0.0
    %1909 = vmatprep.subr.mxu0 0.0
    %1910 = vmatpush1.xpose.msra.mxu0 0.0
    %1911 = vmatprep.subr.mxu0 0.0
    %1912 = vmatpush1.xpose.msra.mxu0 0.0
    %1913 = vmatprep.subr.mxu0 0.0
    %1914 = vmatpush1.xpose.msra.mxu0 0.0
    %1915 = vmatprep.subr.mxu0 0.0
    %1916 = vmatpush1.xpose.msra.mxu0 0.0
    %1917 = vmatprep.subr.mxu0 0.0
    %1918 = vmatpush1.xpose.msra.mxu0 0.0
    %1919 = vmatprep.subr.mxu0 0.0
    %1920 = vmatpush1.xpose.msra.mxu0 0.0
    %1921 = vmatprep.subr.mxu0 0.0
    %1922 = vmatpush1.xpose.msra.mxu0 0.0
    %1923 = vmatprep.subr.mxu0 0.0
    %1924 = vmatpush1.xpose.msra.mxu0 %v1905
    %1925 = vmatprep.subr.mxu0 0.0
    %1926 = vmatpush1.xpose.msra.mxu0 %v1903
    %1927 = vmatprep.subr.mxu0 0.0
    %1928 = vmatpush1.xpose.msra.mxu0 %v1901
    %1929 = vmatprep.subr.mxu0 0.0
    %1930 = vmatpush1.xpose.msra.mxu0 %v1899
    %1931 = vmatprep.subr.mxu0 0.0
    %1932 = vmatpush1.xpose.msra.mxu0 %v1897
    %1933 = vmatprep.subr.mxu0 0.0
    %1934 = vmatpush1.xpose.msra.mxu0 %v1895
    %1935 = vmatprep.subr.mxu0 0.0
    %1936 = vmatpush1.xpose.msra.mxu0 %v1893
    %1937 = vmatprep.subr.mxu0 0.0
    %1938 = vmatpush1.xpose.msra.mxu0 %v1891
    %1939 = vmatprep.subr.mxu0 0.0
    %1940 = vmatpush2.xpose.msra.mxu0 0.0
    %1941 = vmatprep.subr.mxu0 0.0
    %1942 = vmatpush2.xpose.msra.mxu0 0.0
    %1943 = vmatprep.subr.mxu0 0.0
    %1944 = vmatpush2.xpose.msra.mxu0 0.0
    %1945 = vmatprep.subr.mxu0 0.0
    %1946 = vmatpush2.xpose.msra.mxu0 0.0
    %1947 = vmatprep.subr.mxu0 0.0
    %1948 = vmatpush2.xpose.msra.mxu0 0.0
    %1949 = vmatprep.subr.mxu0 0.0
    %1950 = vmatpush2.xpose.msra.mxu0 0.0
    %1951 = vmatprep.subr.mxu0 0.0
    %1952 = vmatpush2.xpose.msra.mxu0 0.0
    %1953 = vmatprep.subr.mxu0 0.0
    %1954 = vmatpush2.xpose.msra.mxu0 0.0
    %1955 = vmatprep.subr.mxu0 0.0
    %1956 = vmatpush2.xpose.msra.mxu0 0.0
    %1957 = vmatprep.subr.mxu0 0.0
    %1958 = vmatpush2.xpose.msra.mxu0 0.0
    %1959 = vmatprep.subr.mxu0 0.0
    %1960 = vmatpush2.xpose.msra.mxu0 0.0
    %1961 = vmatprep.subr.mxu0 0.0
    %1962 = vmatpush2.xpose.msra.mxu0 0.0
    %1963 = vmatprep.subr.mxu0 0.0
    %1964 = vmatpush2.xpose.msra.mxu0 0.0
    %1965 = vmatprep.subr.mxu0 0.0
    %1966 = vmatpush2.xpose.msra.mxu0 0.0
    %1967 = vmatprep.subr.mxu0 0.0
    %1968 = vmatpush2.xpose.msra.mxu0 0.0
    %1969 = vmatprep.subr.mxu0 0.0
    %1970 = vmatpush2.xpose.msra.mxu0 0.0
    %1971 = vmatprep.mubr.f32.mxu0 0.0
    %1972 = vmatmul.mubr.f32.gmra.mxu0 %v1887
    %v1973 = vpop.f32.mrf.mxu0
    %v1974 = vadd.f32 %v384, %v1973
    %v1975 = vpop.f32.mrf.mxu0
    %1976 = vmatprep.mubr.f32.mxu0 0.0
    %1977 = vmatmul.mubr.f32.gmra.mxu0 %v1889
    %v1978 = vpop.f32.mrf.mxu0
    %v1979 = vadd.f32 %v385, %v1978
    %v1980 = vpop.f32.mrf.mxu0
    %1981 = vdwg.mxu0
    %v1982 = vsel %vm492, %v1974, -inf
    %1983 = vmax.xlane.f32.xlu0 %v1982
    %v1984 = vpop.xlane.xlu0 %1983
    %v1985 = vsel %vm492, %v1979, -inf
    %1986 = vmax.xlane.f32.xlu0 %v1985
    %v1987 = vpop.xlane.xlu0 %1986
    %v1988 = vsub.f32 %v1974, %v1984
    %v1989 = vsub.f32 %v1979, %v1987
    %v1990 = vmul.f32 %v1988, 1.442695
    %v1991 = vpow.pop %v1990
    %v1992 = vmul.f32 %v1989, 1.442695
    %v1993 = vpow.pop %v1992
    %v1994 = vsel %vm492, %v1991, 0.0
    %1995 = vadd.xlane.f32.xlu0 %v1994
    %v1996 = vpop.xlane.xlu0 %1995
    %v1997 = vsel %vm492, %v1993, 0.0
    %1998 = vadd.xlane.f32.xlu0 %v1997
    %v1999 = vpop.xlane.xlu0 %1998
    %v2000 = vrcp.pop %v1996
    %v2001 = vrcp.pop %v1999
    %v2002 = vmul.f32 %v1991, %v2000
    %v2003 = vmul.f32 %v1993, %v2001
    %2004 = vrot.lane.b32.xlu0 %v336, 80
    %v2005 = vpop.permute.xlu0 %2004
    %2006 = vrot.lane.b32.xlu0 %v341, 80
    %v2007 = vpop.permute.xlu0 %2006
    %2008 = vrot.lane.b32.xlu0 %v346, 80
    %v2009 = vpop.permute.xlu0 %2008
    %2010 = vrot.lane.b32.xlu0 %v351, 80
    %v2011 = vpop.permute.xlu0 %2010
    %2012 = vrot.lane.b32.xlu0 %v356, 80
    %v2013 = vpop.permute.xlu0 %2012
    %2014 = vrot.lane.b32.xlu0 %v361, 80
    %v2015 = vpop.permute.xlu0 %2014
    %2016 = vrot.lane.b32.xlu0 %v366, 80
    %v2017 = vpop.permute.xlu0 %2016
    %2018 = vrot.lane.b32.xlu0 %v371, 80
    %v2019 = vpop.permute.xlu0 %2018
    %v2029 = vsel %vm492, %v2002, 0
    %v2032 = vsel %vm492, %v2003, 0
    %2034 = vmatprep.subr.mxu0 0.0
    %2035 = vmatpush1.msra.mxu0 0.0
    %2036 = vmatprep.subr.mxu0 0.0
    %2037 = vmatpush1.msra.mxu0 0.0
    %2038 = vmatprep.subr.mxu0 0.0
    %2039 = vmatpush1.msra.mxu0 0.0
    %2040 = vmatprep.subr.mxu0 0.0
    %2041 = vmatpush1.msra.mxu0 0.0
    %2042 = vmatprep.subr.mxu0 0.0
    %2043 = vmatpush1.msra.mxu0 0.0
    %2044 = vmatprep.subr.mxu0 0.0
    %2045 = vmatpush1.msra.mxu0 0.0
    %2046 = vmatprep.subr.mxu0 0.0
    %2047 = vmatpush1.msra.mxu0 0.0
    %2048 = vmatprep.subr.mxu0 0.0
    %2049 = vmatpush1.msra.mxu0 0.0
    %2050 = vmatprep.subr.mxu0 0.0
    %2051 = vmatpush1.msra.mxu0 %v2019
    %2052 = vmatprep.subr.mxu0 0.0
    %2053 = vmatpush1.msra.mxu0 %v2017
    %2054 = vmatprep.subr.mxu0 0.0
    %2055 = vmatpush1.msra.mxu0 %v2015
    %2056 = vmatprep.subr.mxu0 0.0
    %2057 = vmatpush1.msra.mxu0 %v2013
    %2058 = vmatprep.subr.mxu0 0.0
    %2059 = vmatpush1.msra.mxu0 %v2011
    %2060 = vmatprep.subr.mxu0 0.0
    %2061 = vmatpush1.msra.mxu0 %v2009
    %2062 = vmatprep.subr.mxu0 0.0
    %2063 = vmatpush1.msra.mxu0 %v2007
    %2064 = vmatprep.subr.mxu0 0.0
    %2065 = vmatpush1.msra.mxu0 %v2005
    %2066 = vmatprep.subr.mxu0 0.0
    %2067 = vmatpush2.msra.mxu0 0.0
    %2068 = vmatprep.subr.mxu0 0.0
    %2069 = vmatpush2.msra.mxu0 0.0
    %2070 = vmatprep.subr.mxu0 0.0
    %2071 = vmatpush2.msra.mxu0 0.0
    %2072 = vmatprep.subr.mxu0 0.0
    %2073 = vmatpush2.msra.mxu0 0.0
    %2074 = vmatprep.subr.mxu0 0.0
    %2075 = vmatpush2.msra.mxu0 0.0
    %2076 = vmatprep.subr.mxu0 0.0
    %2077 = vmatpush2.msra.mxu0 0.0
    %2078 = vmatprep.subr.mxu0 0.0
    %2079 = vmatpush2.msra.mxu0 0.0
    %2080 = vmatprep.subr.mxu0 0.0
    %2081 = vmatpush2.msra.mxu0 0.0
    %2082 = vmatprep.subr.mxu0 0.0
    %2083 = vmatpush2.msra.mxu0 0.0
    %2084 = vmatprep.subr.mxu0 0.0
    %2085 = vmatpush2.msra.mxu0 0.0
    %2086 = vmatprep.subr.mxu0 0.0
    %2087 = vmatpush2.msra.mxu0 0.0
    %2088 = vmatprep.subr.mxu0 0.0
    %2089 = vmatpush2.msra.mxu0 0.0
    %2090 = vmatprep.subr.mxu0 0.0
    %2091 = vmatpush2.msra.mxu0 0.0
    %2092 = vmatprep.subr.mxu0 0.0
    %2093 = vmatpush2.msra.mxu0 0.0
    %2094 = vmatprep.subr.mxu0 0.0
    %2095 = vmatpush2.msra.mxu0 0.0
    %2096 = vmatprep.subr.mxu0 0.0
    %2097 = vmatpush2.msra.mxu0 0.0
    %2098 = vmatprep.mubr.f32.mxu0 0.0
    %2099 = vmatmul.mubr.f32.gmra.mxu0 %v2029
    %v2100 = vpop.f32.mrf.mxu0
    %v2101 = vadd.f32 0.0, %v2100
    %v2102 = vpop.f32.mrf.mxu0
    %2103 = vmatprep.mubr.f32.mxu0 0.0
    %2104 = vmatmul.mubr.f32.gmra.mxu0 %v2032
    %v2105 = vpop.f32.mrf.mxu0
    %v2106 = vadd.f32 0.0, %v2105
    %v2107 = vpop.f32.mrf.mxu0
    %2108 = vdwg.mxu0
    %2111 = vrot.lane.b32.xlu0 %v2101, 16
    %v2112 = vpop.permute.xlu0 %2111
    %2113 = vrot.lane.b32.xlu0 %v2106, 16
    %v2114 = vpop.permute.xlu0 %2113
    %2117 = vst.msk [vmem:[#allocation2 + $0x10] sm:$0xff] %vm1125, %v2112
    %2118 = vst.msk [vmem:[#allocation2 + $0x18] sm:$0xff] %vm1125, %v2114
    %2119 = vrot.lane.b32.xlu0 %v160, 104
    %v2120 = vpop.permute.xlu0 %2119
    %2121 = vrot.lane.b32.xlu0 %v161, 104
    %v2122 = vpop.permute.xlu0 %2121
    %2123 = vrot.lane.b32.xlu0 %v336, 104
    %v2124 = vpop.permute.xlu0 %2123
    %2125 = vrot.lane.b32.xlu0 %v341, 104
    %v2126 = vpop.permute.xlu0 %2125
    %2127 = vrot.lane.b32.xlu0 %v346, 104
    %v2128 = vpop.permute.xlu0 %2127
    %2129 = vrot.lane.b32.xlu0 %v351, 104
    %v2130 = vpop.permute.xlu0 %2129
    %2131 = vrot.lane.b32.xlu0 %v356, 104
    %v2132 = vpop.permute.xlu0 %2131
    %2133 = vrot.lane.b32.xlu0 %v361, 104
    %v2134 = vpop.permute.xlu0 %2133
    %2135 = vrot.lane.b32.xlu0 %v366, 104
    %v2136 = vpop.permute.xlu0 %2135
    %2137 = vrot.lane.b32.xlu0 %v371, 104
    %v2138 = vpop.permute.xlu0 %2137
    %v2139 = vsel %vm386, %v2120, 0
    %v2141 = vsel %vm386, %v2122, 0
    %v2143 = vsel %vm386, %v2124, 0
    %v2145 = vsel %vm386, %v2126, 0
    %v2147 = vsel %vm386, %v2128, 0
    %v2149 = vsel %vm386, %v2130, 0
    %v2151 = vsel %vm386, %v2132, 0
    %v2153 = vsel %vm386, %v2134, 0
    %v2155 = vsel %vm386, %v2136, 0
    %v2157 = vsel %vm386, %v2138, 0
    %2159 = vmatprep.subr.mxu0 0.0
    %2160 = vmatpush1.xpose.msra.mxu0 0.0
    %2161 = vmatprep.subr.mxu0 0.0
    %2162 = vmatpush1.xpose.msra.mxu0 0.0
    %2163 = vmatprep.subr.mxu0 0.0
    %2164 = vmatpush1.xpose.msra.mxu0 0.0
    %2165 = vmatprep.subr.mxu0 0.0
    %2166 = vmatpush1.xpose.msra.mxu0 0.0
    %2167 = vmatprep.subr.mxu0 0.0
    %2168 = vmatpush1.xpose.msra.mxu0 0.0
    %2169 = vmatprep.subr.mxu0 0.0
    %2170 = vmatpush1.xpose.msra.mxu0 0.0
    %2171 = vmatprep.subr.mxu0 0.0
    %2172 = vmatpush1.xpose.msra.mxu0 0.0
    %2173 = vmatprep.subr.mxu0 0.0
    %2174 = vmatpush1.xpose.msra.mxu0 0.0
    %2175 = vmatprep.subr.mxu0 0.0
    %2176 = vmatpush1.xpose.msra.mxu0 %v2157
    %2177 = vmatprep.subr.mxu0 0.0
    %2178 = vmatpush1.xpose.msra.mxu0 %v2155
    %2179 = vmatprep.subr.mxu0 0.0
    %2180 = vmatpush1.xpose.msra.mxu0 %v2153
    %2181 = vmatprep.subr.mxu0 0.0
    %2182 = vmatpush1.xpose.msra.mxu0 %v2151
    %2183 = vmatprep.subr.mxu0 0.0
    %2184 = vmatpush1.xpose.msra.mxu0 %v2149
    %2185 = vmatprep.subr.mxu0 0.0
    %2186 = vmatpush1.xpose.msra.mxu0 %v2147
    %2187 = vmatprep.subr.mxu0 0.0
    %2188 = vmatpush1.xpose.msra.mxu0 %v2145
    %2189 = vmatprep.subr.mxu0 0.0
    %2190 = vmatpush1.xpose.msra.mxu0 %v2143
    %2191 = vmatprep.subr.mxu0 0.0
    %2192 = vmatpush2.xpose.msra.mxu0 0.0
    %2193 = vmatprep.subr.mxu0 0.0
    %2194 = vmatpush2.xpose.msra.mxu0 0.0
    %2195 = vmatprep.subr.mxu0 0.0
    %2196 = vmatpush2.xpose.msra.mxu0 0.0
    %2197 = vmatprep.subr.mxu0 0.0
    %2198 = vmatpush2.xpose.msra.mxu0 0.0
    %2199 = vmatprep.subr.mxu0 0.0
    %2200 = vmatpush2.xpose.msra.mxu0 0.0
    %2201 = vmatprep.subr.mxu0 0.0
    %2202 = vmatpush2.xpose.msra.mxu0 0.0
    %2203 = vmatprep.subr.mxu0 0.0
    %2204 = vmatpush2.xpose.msra.mxu0 0.0
    %2205 = vmatprep.subr.mxu0 0.0
    %2206 = vmatpush2.xpose.msra.mxu0 0.0
    %2207 = vmatprep.subr.mxu0 0.0
    %2208 = vmatpush2.xpose.msra.mxu0 0.0
    %2209 = vmatprep.subr.mxu0 0.0
    %2210 = vmatpush2.xpose.msra.mxu0 0.0
    %2211 = vmatprep.subr.mxu0 0.0
    %2212 = vmatpush2.xpose.msra.mxu0 0.0
    %2213 = vmatprep.subr.mxu0 0.0
    %2214 = vmatpush2.xpose.msra.mxu0 0.0
    %2215 = vmatprep.subr.mxu0 0.0
    %2216 = vmatpush2.xpose.msra.mxu0 0.0
    %2217 = vmatprep.subr.mxu0 0.0
    %2218 = vmatpush2.xpose.msra.mxu0 0.0
    %2219 = vmatprep.subr.mxu0 0.0
    %2220 = vmatpush2.xpose.msra.mxu0 0.0
    %2221 = vmatprep.subr.mxu0 0.0
    %2222 = vmatpush2.xpose.msra.mxu0 0.0
    %2223 = vmatprep.mubr.f32.mxu0 0.0
    %2224 = vmatmul.mubr.f32.gmra.mxu0 %v2139
    %v2225 = vpop.f32.mrf.mxu0
    %v2226 = vadd.f32 %v384, %v2225
    %v2227 = vpop.f32.mrf.mxu0
    %2228 = vmatprep.mubr.f32.mxu0 0.0
    %2229 = vmatmul.mubr.f32.gmra.mxu0 %v2141
    %v2230 = vpop.f32.mrf.mxu0
    %v2231 = vadd.f32 %v385, %v2230
    %v2232 = vpop.f32.mrf.mxu0
    %2233 = vdwg.mxu0
    %v2234 = vsel %vm492, %v2226, -inf
    %2235 = vmax.xlane.f32.xlu0 %v2234
    %v2236 = vpop.xlane.xlu0 %2235
    %v2237 = vsel %vm492, %v2231, -inf
    %2238 = vmax.xlane.f32.xlu0 %v2237
    %v2239 = vpop.xlane.xlu0 %2238
    %v2240 = vsub.f32 %v2226, %v2236
    %v2241 = vsub.f32 %v2231, %v2239
    %v2242 = vmul.f32 %v2240, 1.442695
    %v2243 = vpow.pop %v2242
    %v2244 = vmul.f32 %v2241, 1.442695
    %v2245 = vpow.pop %v2244
    %v2246 = vsel %vm492, %v2243, 0.0
    %2247 = vadd.xlane.f32.xlu0 %v2246
    %v2248 = vpop.xlane.xlu0 %2247
    %v2249 = vsel %vm492, %v2245, 0.0
    %2250 = vadd.xlane.f32.xlu0 %v2249
    %v2251 = vpop.xlane.xlu0 %2250
    %v2252 = vrcp.pop %v2248
    %v2253 = vrcp.pop %v2251
    %v2254 = vmul.f32 %v2243, %v2252
    %v2255 = vmul.f32 %v2245, %v2253
    %2256 = vrot.lane.b32.xlu0 %v336, 72
    %v2257 = vpop.permute.xlu0 %2256
    %2258 = vrot.lane.b32.xlu0 %v341, 72
    %v2259 = vpop.permute.xlu0 %2258
    %2260 = vrot.lane.b32.xlu0 %v346, 72
    %v2261 = vpop.permute.xlu0 %2260
    %2262 = vrot.lane.b32.xlu0 %v351, 72
    %v2263 = vpop.permute.xlu0 %2262
    %2264 = vrot.lane.b32.xlu0 %v356, 72
    %v2265 = vpop.permute.xlu0 %2264
    %2266 = vrot.lane.b32.xlu0 %v361, 72
    %v2267 = vpop.permute.xlu0 %2266
    %2268 = vrot.lane.b32.xlu0 %v366, 72
    %v2269 = vpop.permute.xlu0 %2268
    %2270 = vrot.lane.b32.xlu0 %v371, 72
    %v2271 = vpop.permute.xlu0 %2270
    %v2281 = vsel %vm492, %v2254, 0
    %v2284 = vsel %vm492, %v2255, 0
    %2286 = vmatprep.subr.mxu0 0.0
    %2287 = vmatpush1.msra.mxu0 0.0
    %2288 = vmatprep.subr.mxu0 0.0
    %2289 = vmatpush1.msra.mxu0 0.0
    %2290 = vmatprep.subr.mxu0 0.0
    %2291 = vmatpush1.msra.mxu0 0.0
    %2292 = vmatprep.subr.mxu0 0.0
    %2293 = vmatpush1.msra.mxu0 0.0
    %2294 = vmatprep.subr.mxu0 0.0
    %2295 = vmatpush1.msra.mxu0 0.0
    %2296 = vmatprep.subr.mxu0 0.0
    %2297 = vmatpush1.msra.mxu0 0.0
    %2298 = vmatprep.subr.mxu0 0.0
    %2299 = vmatpush1.msra.mxu0 0.0
    %2300 = vmatprep.subr.mxu0 0.0
    %2301 = vmatpush1.msra.mxu0 0.0
    %2302 = vmatprep.subr.mxu0 0.0
    %2303 = vmatpush1.msra.mxu0 %v2271
    %2304 = vmatprep.subr.mxu0 0.0
    %2305 = vmatpush1.msra.mxu0 %v2269
    %2306 = vmatprep.subr.mxu0 0.0
    %2307 = vmatpush1.msra.mxu0 %v2267
    %2308 = vmatprep.subr.mxu0 0.0
    %2309 = vmatpush1.msra.mxu0 %v2265
    %2310 = vmatprep.subr.mxu0 0.0
    %2311 = vmatpush1.msra.mxu0 %v2263
    %2312 = vmatprep.subr.mxu0 0.0
    %2313 = vmatpush1.msra.mxu0 %v2261
    %2314 = vmatprep.subr.mxu0 0.0
    %2315 = vmatpush1.msra.mxu0 %v2259
    %2316 = vmatprep.subr.mxu0 0.0
    %2317 = vmatpush1.msra.mxu0 %v2257
    %2318 = vmatprep.subr.mxu0 0.0
    %2319 = vmatpush2.msra.mxu0 0.0
    %2320 = vmatprep.subr.mxu0 0.0
    %2321 = vmatpush2.msra.mxu0 0.0
    %2322 = vmatprep.subr.mxu0 0.0
    %2323 = vmatpush2.msra.mxu0 0.0
    %2324 = vmatprep.subr.mxu0 0.0
    %2325 = vmatpush2.msra.mxu0 0.0
    %2326 = vmatprep.subr.mxu0 0.0
    %2327 = vmatpush2.msra.mxu0 0.0
    %2328 = vmatprep.subr.mxu0 0.0
    %2329 = vmatpush2.msra.mxu0 0.0
    %2330 = vmatprep.subr.mxu0 0.0
    %2331 = vmatpush2.msra.mxu0 0.0
    %2332 = vmatprep.subr.mxu0 0.0
    %2333 = vmatpush2.msra.mxu0 0.0
    %2334 = vmatprep.subr.mxu0 0.0
    %2335 = vmatpush2.msra.mxu0 0.0
    %2336 = vmatprep.subr.mxu0 0.0
    %2337 = vmatpush2.msra.mxu0 0.0
    %2338 = vmatprep.subr.mxu0 0.0
    %2339 = vmatpush2.msra.mxu0 0.0
    %2340 = vmatprep.subr.mxu0 0.0
    %2341 = vmatpush2.msra.mxu0 0.0
    %2342 = vmatprep.subr.mxu0 0.0
    %2343 = vmatpush2.msra.mxu0 0.0
    %2344 = vmatprep.subr.mxu0 0.0
    %2345 = vmatpush2.msra.mxu0 0.0
    %2346 = vmatprep.subr.mxu0 0.0
    %2347 = vmatpush2.msra.mxu0 0.0
    %2348 = vmatprep.subr.mxu0 0.0
    %2349 = vmatpush2.msra.mxu0 0.0
    %2350 = vmatprep.mubr.f32.mxu0 0.0
    %2351 = vmatmul.mubr.f32.gmra.mxu0 %v2281
    %v2352 = vpop.f32.mrf.mxu0
    %v2353 = vadd.f32 0.0, %v2352
    %v2354 = vpop.f32.mrf.mxu0
    %2355 = vmatprep.mubr.f32.mxu0 0.0
    %2356 = vmatmul.mubr.f32.gmra.mxu0 %v2284
    %v2357 = vpop.f32.mrf.mxu0
    %v2358 = vadd.f32 0.0, %v2357
    %v2359 = vpop.f32.mrf.mxu0
    %2360 = vdwg.mxu0
    %2363 = vrot.lane.b32.xlu0 %v2353, 24
    %v2364 = vpop.permute.xlu0 %2363
    %2365 = vrot.lane.b32.xlu0 %v2358, 24
    %v2366 = vpop.permute.xlu0 %2365
    %2369 = vst.msk [vmem:[#allocation2 + $0x10] sm:$0xff] %vm1378, %v2364
    %2370 = vst.msk [vmem:[#allocation2 + $0x18] sm:$0xff] %vm1378, %v2366
    %v2371 = vld [vmem:[#allocation2] sm:$0xff]
    %v2372 = vld [vmem:[#allocation2 + $0x8] sm:$0xff]
    %v2373 = vld [vmem:[#allocation2 + $0x10] sm:$0xff]
    %v2374 = vld [vmem:[#allocation2 + $0x18] sm:$0xff]
    %v2375 = vld [vmem:[#allocation3] sm:$0xff]
    %v2376 = vld [vmem:[#allocation3 + $0x8] sm:$0xff]
    %v2377 = vld [vmem:[#allocation3 + $0x10] sm:$0xff]
    %v2378 = vld [vmem:[#allocation3 + $0x18] sm:$0xff]
    %v2379 = vld [vmem:[%s7] sm:$0x1]
    %v2381 = vlaneseq
    %v2382 = vshrl.u32 %v2381, 7
    %v2383 = vsub.s32 0, %v2382
    %v2384 = vrot.slane %v2379, %v2383
    %v2387 = vsel %vm60, %v2371, 0
    %v2390 = vsel %vm60, %v2372, 0
    %v2393 = vsel %vm60, %v2373, 0
    %v2396 = vsel %vm60, %v2374, 0
    %2398 = vmatprep.subr.mxu0 0.0
    %2399 = vmatpush1.msra.mxu0 0.0
    %2400 = vmatprep.subr.mxu0 0.0
    %2401 = vmatpush1.msra.mxu0 0.0
    %2402 = vmatprep.subr.mxu0 0.0
    %2403 = vmatpush1.msra.mxu0 0.0
    %2404 = vmatprep.subr.mxu0 0.0
    %2405 = vmatpush1.msra.mxu0 0.0
    %2406 = vmatprep.subr.mxu0 0.0
    %2407 = vmatpush1.msra.mxu0 0.0
    %2408 = vmatprep.subr.mxu0 0.0
    %2409 = vmatpush1.msra.mxu0 0.0
    %2410 = vmatprep.subr.mxu0 0.0
    %2411 = vmatpush1.msra.mxu0 0.0
    %2412 = vmatprep.subr.mxu0 0.0
    %2413 = vmatpush1.msra.mxu0 0.0
    %2414 = vmatprep.subr.mxu0 0.0
    %2415 = vmatpush1.msra.mxu0 0.0
    %2416 = vmatprep.subr.mxu0 0.0
    %2417 = vmatpush1.msra.mxu0 0.0
    %2418 = vmatprep.subr.mxu0 0.0
    %2419 = vmatpush1.msra.mxu0 0.0
    %2420 = vmatprep.subr.mxu0 0.0
    %2421 = vmatpush1.msra.mxu0 0.0
    %2422 = vmatprep.subr.mxu0 0.0
    %2423 = vmatpush1.msra.mxu0 %v2378
    %2424 = vmatprep.subr.mxu0 0.0
    %2425 = vmatpush1.msra.mxu0 %v2377
    %2426 = vmatprep.subr.mxu0 0.0
    %2427 = vmatpush1.msra.mxu0 %v2376
    %2428 = vmatprep.subr.mxu0 0.0
    %2429 = vmatpush1.msra.mxu0 %v2375
    %2430 = vmatprep.subr.mxu0 0.0
    %2431 = vmatpush2.msra.mxu0 0.0
    %2432 = vmatprep.subr.mxu0 0.0
    %2433 = vmatpush2.msra.mxu0 0.0
    %2434 = vmatprep.subr.mxu0 0.0
    %2435 = vmatpush2.msra.mxu0 0.0
    %2436 = vmatprep.subr.mxu0 0.0
    %2437 = vmatpush2.msra.mxu0 0.0
    %2438 = vmatprep.subr.mxu0 0.0
    %2439 = vmatpush2.msra.mxu0 0.0
    %2440 = vmatprep.subr.mxu0 0.0
    %2441 = vmatpush2.msra.mxu0 0.0
    %2442 = vmatprep.subr.mxu0 0.0
    %2443 = vmatpush2.msra.mxu0 0.0
    %2444 = vmatprep.subr.mxu0 0.0
    %2445 = vmatpush2.msra.mxu0 0.0
    %2446 = vmatprep.subr.mxu0 0.0
    %2447 = vmatpush2.msra.mxu0 0.0
    %2448 = vmatprep.subr.mxu0 0.0
    %2449 = vmatpush2.msra.mxu0 0.0
    %2450 = vmatprep.subr.mxu0 0.0
    %2451 = vmatpush2.msra.mxu0 0.0
    %2452 = vmatprep.subr.mxu0 0.0
    %2453 = vmatpush2.msra.mxu0 0.0
    %2454 = vmatprep.subr.mxu0 0.0
    %2455 = vmatpush2.msra.mxu0 0.0
    %2456 = vmatprep.subr.mxu0 0.0
    %2457 = vmatpush2.msra.mxu0 0.0
    %2458 = vmatprep.subr.mxu0 0.0
    %2459 = vmatpush2.msra.mxu0 0.0
    %2460 = vmatprep.subr.mxu0 0.0
    %2461 = vmatpush2.msra.mxu0 0.0
    %2462 = vmatprep.mubr.f32.mxu0 0.0
    %2463 = vmatmul.mubr.f32.gmra.mxu0 %v2387
    %v2464 = vpop.f32.mrf.mxu0
    %v2465 = vadd.f32 %v2384, %v2464
    %v2466 = vpop.f32.mrf.mxu0
    %2467 = vmatprep.mubr.f32.mxu0 0.0
    %2468 = vmatmul.mubr.f32.gmra.mxu0 %v2390
    %v2469 = vpop.f32.mrf.mxu0
    %v2470 = vadd.f32 %v2384, %v2469
    %v2471 = vpop.f32.mrf.mxu0
    %2472 = vmatprep.mubr.f32.mxu0 0.0
    %2473 = vmatmul.mubr.f32.gmra.mxu0 %v2393
    %v2474 = vpop.f32.mrf.mxu0
    %v2475 = vadd.f32 %v2384, %v2474
    %v2476 = vpop.f32.mrf.mxu0
    %2477 = vmatprep.mubr.f32.mxu0 0.0
    %2478 = vmatmul.mubr.f32.gmra.mxu0 %v2396
    %v2479 = vpop.f32.mrf.mxu0
    %v2480 = vadd.f32 %v2384, %v2479
    %v2481 = vpop.f32.mrf.mxu0
    %2482 = vdwg.mxu0
    %2483 = vst.msk [vmem:[#allocation6] sm:$0xff] %vm60, %v2465
    %2484 = vst.msk [vmem:[#allocation6 + $0x8] sm:$0xff] %vm60, %v2470
    %2485 = vst.msk [vmem:[#allocation6 + $0x10] sm:$0xff] %vm60, %v2475
    %2486 = vst.msk [vmem:[#allocation6 + $0x18] sm:$0xff] %vm60, %v2480
    // Predicated region
    $region38: #{tpu_custom_call.1} parent=1 // pred_check
      _
    $region39: #{tpu_custom_call.1} parent=1 // pred_check_branch
      %2488 = sbr.rel (0) target = $region41
    $region40: #{tpu_custom_call.1} parent=1 // pred_region
      %s2490 = ssub.s32 512, 512
      %2491 = vsyncadd [#allocation5], %s2490
      %s2492 = sshll.u32 [#allocation6], 4
      %s2493 = int_to_ptr.vmem [resolvable:$true] %s2492
      %2498 = dma.vmem_to_hbm [thread:$0]  %s2493, 512, %s8, [#allocation5], 128, 128, 8
    $region41: #{tpu_custom_call.1} parent=1 // pred_fallthru
      _
    // Predicated region
    $region42: #{tpu_custom_call.1} parent=1 // pred_check
      _
    $region43: #{tpu_custom_call.1} parent=1 // pred_check_branch
      %2500 = sbr.rel (0) target = $region45
    $region44: #{tpu_custom_call.1} parent=1 // pred_region
      %2501 = dma.done [#allocation5], 512
    $region45: #{tpu_custom_call.1} parent=1 // pred_fallthru
      _
    %2502 = vsyncpa [#allocation4], 1
    %2503 = vsyncpa [#allocation5], 1

</llo_original>
